<compile_context>
chip_gen: v5e
topology: v5e:2x2
jax: 0.10.0
libtpu: 0.0.40
codegen_flags: <defaults>
</compile_context>

<pallas_src>
import jax
import jax.numpy as jnp
from jax.experimental import pallas as pl
from jax.experimental.pallas import tpu as pltpu


_LANE_TILE = 512   # multiple of 128: lane tile of the conv-output M axis
_ROW_TILE = 256    # multiple of 8: batch-row tile for the fused FC stack


# ----------------------------------------------------------------------------
# Pallas kernels
# ----------------------------------------------------------------------------

def _conv_relu_pool_kernel(p00_ref, p01_ref, p10_ref, p11_ref, w_ref, b_ref,
                           o_ref):
    # out = 0.25 * sum_{dy,dx} relu(W @ P_{dy,dx} + b)
    # i.e. conv-as-matmul + bias + ReLU fused with the 2x2 average pool.
    w = w_ref[...]                       # (Cout, K) bf16
    b = b_ref[...]                       # (Cout, 1) f32
    acc = jnp.maximum(
        jnp.dot(w, p00_ref[...], preferred_element_type=jnp.float32) + b, 0.0)
    acc = acc + jnp.maximum(
        jnp.dot(w, p01_ref[...], preferred_element_type=jnp.float32) + b, 0.0)
    acc = acc + jnp.maximum(
        jnp.dot(w, p10_ref[...], preferred_element_type=jnp.float32) + b, 0.0)
    acc = acc + jnp.maximum(
        jnp.dot(w, p11_ref[...], preferred_element_type=jnp.float32) + b, 0.0)
    o_ref[...] = (acc * 0.25).astype(o_ref.dtype)


def _fc_stack_kernel(x_ref, w1_ref, b1_ref, w2_ref, b2_ref, w3_ref, b3_ref,
                     o_ref):
    # out = softmax(relu(relu(relu(x@W1+b1)@W2+b2)@W3+b3), axis=1)
    # (the spec applies ReLU to fc3 as well, then softmax)
    h = jnp.dot(x_ref[...], w1_ref[...], preferred_element_type=jnp.float32)
    h = jnp.maximum(h + b1_ref[...], 0.0)
    h = jnp.dot(h.astype(jnp.bfloat16), w2_ref[...],
                preferred_element_type=jnp.float32)
    h = jnp.maximum(h + b2_ref[...], 0.0)
    h = jnp.dot(h.astype(jnp.bfloat16), w3_ref[...],
                preferred_element_type=jnp.float32)
    h = jnp.maximum(h + b3_ref[...], 0.0)
    m = jnp.max(h, axis=1, keepdims=True)
    e = jnp.exp(h - m)
    s = jnp.sum(e, axis=1, keepdims=True)
    o_ref[...] = (e * pl.reciprocal(s, approx=True)).astype(o_ref.dtype)


# ----------------------------------------------------------------------------
# Wrappers (pallas_call plumbing)
# ----------------------------------------------------------------------------

def conv_relu_pool(p_mats, wt, b):
    """Fused conv(5x5,valid) + bias + ReLU + 2x2 avg-pool.

    p_mats: 4 transposed patch matrices (K, M) bf16, one per pool offset;
            column order (n, ph, pw).
    wt:     (Cout, K) bf16 packed conv weight.
    b:      (Cout, 1) f32 bias.
    Returns (Cout, M) bf16 pooled activation (lane-dense in M).
    """
    cout, k = wt.shape
    m = p_mats[0].shape[1]
    mt = m if m <= _LANE_TILE else _LANE_TILE
    p_spec = pl.BlockSpec((k, mt), lambda i: (0, i))
    return pl.pallas_call(
        _conv_relu_pool_kernel,
        out_shape=jax.ShapeDtypeStruct((cout, m), jnp.bfloat16),
        grid_spec=pltpu.PrefetchScalarGridSpec(
            num_scalar_prefetch=0,
            grid=(pl.cdiv(m, mt),),
            in_specs=[p_spec, p_spec, p_spec, p_spec,
                      pl.BlockSpec((cout, k), lambda i: (0, 0)),
                      pl.BlockSpec((cout, 1), lambda i: (0, 0))],
            out_specs=pl.BlockSpec((cout, mt), lambda i: (0, i)),
        ),
        compiler_params=pltpu.CompilerParams(
            dimension_semantics=("parallel",)),
    )(*p_mats, wt, b)


def fc_stack(x, wf1, bf1, wf2, bf2, wf3, bf3):
    """Fused fc1+ReLU -> fc2+ReLU -> fc3+ReLU -> softmax, tiled over batch."""
    n, k = x.shape
    rt = n if n <= _ROW_TILE else _ROW_TILE

    def inv(_):
        return (0, 0)

    return pl.pallas_call(
        _fc_stack_kernel,
        out_shape=jax.ShapeDtypeStruct((n, wf3.shape[1]), jnp.float32),
        grid_spec=pltpu.PrefetchScalarGridSpec(
            num_scalar_prefetch=0,
            grid=(pl.cdiv(n, rt),),
            in_specs=[pl.BlockSpec((rt, k), lambda i: (i, 0)),
                      pl.BlockSpec(wf1.shape, inv), pl.BlockSpec(bf1.shape, inv),
                      pl.BlockSpec(wf2.shape, inv), pl.BlockSpec(bf2.shape, inv),
                      pl.BlockSpec(wf3.shape, inv), pl.BlockSpec(bf3.shape, inv)],
            out_specs=pl.BlockSpec((rt, wf3.shape[1]), lambda i: (i, 0)),
        ),
        compiler_params=pltpu.CompilerParams(
            dimension_semantics=("parallel",)),
    )(x, wf1, bf1, wf2, bf2, wf3, bf3)


# ----------------------------------------------------------------------------
# Glue: patch extraction (im2col, grouped by pool offset) and weight prep
# ----------------------------------------------------------------------------

def _pooled_patches(a):
    """Im2col for a 5x5 valid conv whose output feeds a 2x2 average pool.

    a: (N, H, W, C).  Returns ([4 x (25*C, N*Ph*Pw)], Ph, Pw): one transposed
    patch matrix per pool offset (dy, dx); row order (i, j, c), column order
    (n, ph, pw) -- matching the weight packing in `prep_params`.
    """
    n, h, w, c = a.shape
    ph, pw = (h - 4) // 2, (w - 4) // 2
    mats = []
    for dy in (0, 1):
        for dx in (0, 1):
            rows = []
            for i in range(5):
                for j in range(5):
                    rows.append(a[:, dy + i: dy + i + 2 * ph: 2,
                                  dx + j: dx + j + 2 * pw: 2, :])  # (N,Ph,Pw,C)
            p = jnp.stack(rows, axis=0)                 # (25, N, Ph, Pw, C)
            p = jnp.moveaxis(p, -1, 1)                  # (25, C, N, Ph, Pw)
            mats.append(p.reshape(25 * c, n * ph * pw).astype(jnp.bfloat16))
    return mats, ph, pw


def prep_params(params):
    """One-time weight packing (hoisted out of the forward path)."""
    f32, bf16 = jnp.float32, jnp.bfloat16

    def conv_pack(w):  # torch layout (Cout, Cin, 5, 5) -> (Cout, 25*Cin)
        co, ci, kh, kw = w.shape
        return jnp.transpose(w, (0, 2, 3, 1)).reshape(co, kh * kw * ci).astype(bf16)

    # Permute fc1 columns from torch's (c, h, w) flatten order to the (h, w, c)
    # order produced by the channels-last pipeline, then transpose for x @ W.
    fc1_hwc = (params["fc1_w"].reshape(120, 16, 5, 5)
               .transpose(0, 2, 3, 1).reshape(120, 400))
    return {
        "w1t": conv_pack(params["conv1_w"]),                       # (6, 25)
        "b1": params["conv1_b"].reshape(6, 1).astype(f32),
        "w2t": conv_pack(params["conv2_w"]),                       # (16, 150)
        "b2": params["conv2_b"].reshape(16, 1).astype(f32),
        "wf1": fc1_hwc.T.astype(bf16),                             # (400, 120)
        "bf1": params["fc1_b"].reshape(1, 120).astype(f32),
        "wf2": params["fc2_w"].T.astype(bf16),                     # (120, 84)
        "bf2": params["fc2_b"].reshape(1, 84).astype(f32),
        "wf3": params["fc3_w"].T.astype(bf16),                     # (84, 10)
        "bf3": params["fc3_b"].reshape(1, 10).astype(f32),
    }


# ----------------------------------------------------------------------------
# LeNet forward
# ----------------------------------------------------------------------------

def lenet_forward(x_nchw, p):
    n = x_nchw.shape[0]
    x = jnp.transpose(x_nchw, (0, 2, 3, 1)).astype(jnp.float32)    # NHWC (N,32,32,1)

    # conv1 (1->6, 5x5) + ReLU + 2x2 avg pool, one fused kernel.
    mats, ph, pw = _pooled_patches(x)                              # 4 x (25, N*196)
    y = conv_relu_pool(mats, p["w1t"], p["b1"])                    # (6, N*196) bf16
    y = y.T.reshape(n, ph, pw, 6)                                  # (N,14,14,6)

    # conv2 (6->16, 5x5) + ReLU + 2x2 avg pool, one fused kernel.
    mats, ph, pw = _pooled_patches(y)                              # 4 x (150, N*25)
    z = conv_relu_pool(mats, p["w2t"], p["b2"])                    # (16, N*25) bf16
    flat = z.T.reshape(n, 400)                                     # (h,w,c) flatten

    # fc1 -> fc2 -> fc3 -> ReLU -> softmax, fully fused.
    return fc_stack(flat, p["wf1"], p["bf1"], p["wf2"], p["bf2"],
                    p["wf3"], p["bf3"])                            # (N, 10)


def init_params(key):
    ks = jax.random.split(key, 10)

    def u(k, shape, fan_in):
        bound = 1.0 / jnp.sqrt(fan_in)
        return jax.random.uniform(k, shape, jnp.float32, -bound, bound)

    return {
        "conv1_w": u(ks[0], (6, 1, 5, 5), 1 * 5 * 5),
        "conv1_b": u(ks[1], (6,), 1 * 5 * 5),
        "conv2_w": u(ks[2], (16, 6, 5, 5), 6 * 5 * 5),
        "conv2_b": u(ks[3], (16,), 6 * 5 * 5),
        "fc1_w": u(ks[4], (120, 400), 400),
        "fc1_b": u(ks[5], (120,), 400),
        "fc2_w": u(ks[6], (84, 120), 120),
        "fc2_b": u(ks[7], (84,), 120),
        "fc3_w": u(ks[8], (10, 84), 84),
        "fc3_b": u(ks[9], (10,), 84),
    }


if __name__ == "__main__":
    key = jax.random.PRNGKey(0)
    pkey, xkey = jax.random.split(key)
    params = init_params(pkey)
    prepped = prep_params(params)          # one-time weight packing

    # LeNet needs 32x32 single-channel input so pool2 flattens to 16*5*5 = 400.
    x = jax.random.normal(xkey, (2, 1, 32, 32), dtype=jnp.float32)

    out = jax.jit(lenet_forward)(x, prepped)
    out = jax.block_until_ready(out)

    assert out.shape == (2, 10)
    assert bool(jnp.all(jnp.isfinite(out)))
    print("KERNEL_OK")
</pallas_src>

<mosaic_0001>
module attributes {stable_mosaic.version = 11 : i64} {
  func.func @_conv_relu_pool_kernel(%arg0: i32, %arg1: memref<25x392xbf16, #tpu.memory_space<vmem>>, %arg2: memref<25x392xbf16, #tpu.memory_space<vmem>>, %arg3: memref<25x392xbf16, #tpu.memory_space<vmem>>, %arg4: memref<25x392xbf16, #tpu.memory_space<vmem>>, %arg5: memref<6x25xbf16, #tpu.memory_space<vmem>>, %arg6: memref<6x1xf32, #tpu.memory_space<vmem>>, %arg7: memref<6x392xbf16, #tpu.memory_space<vmem>>) attributes {dimension_semantics = [#tpu.dimension_semantics<parallel>], iteration_bounds = array<i64: 1>, scalar_prefetch = 0 : i64, scratch_operands = 0 : i64, tpu.core_type = #tpu.core_type<tc>, window_params = [{transform_indices = @transform_0, window_bounds = array<i64: 25, 392>}, {transform_indices = @transform_1, window_bounds = array<i64: 25, 392>}, {transform_indices = @transform_2, window_bounds = array<i64: 25, 392>}, {transform_indices = @transform_3, window_bounds = array<i64: 25, 392>}, {pipeline_mode = #tpu.pipeline_mode<synchronous>, transform_indices = @transform_4, window_bounds = array<i64: 6, 25>}, {pipeline_mode = #tpu.pipeline_mode<synchronous>, transform_indices = @transform_5, window_bounds = array<i64: 6, 1>}, {transform_indices = @transform_6, window_bounds = array<i64: 6, 392>}]} {
    %c0 = arith.constant 0 : index
    %c0_0 = arith.constant 0 : index
    %0 = vector.load %arg5[%c0, %c0_0] : memref<6x25xbf16, #tpu.memory_space<vmem>>, vector<6x25xbf16>
    %c0_1 = arith.constant 0 : index
    %c0_2 = arith.constant 0 : index
    %1 = vector.load %arg6[%c0_1, %c0_2] : memref<6x1xf32, #tpu.memory_space<vmem>>, vector<6x1xf32>
    %c0_3 = arith.constant 0 : index
    %c0_4 = arith.constant 0 : index
    %2 = vector.load %arg1[%c0_3, %c0_4] : memref<25x392xbf16, #tpu.memory_space<vmem>>, vector<25x392xbf16>
    %cst = arith.constant dense<0.000000e+00> : vector<6x392xf32>
    %3 = tpu.matmul %0, %2, %cst {dimension_numbers = #tpu.dot_dimension_numbers<[1], [0], [0], [1], [0, 0, 1, 1], [], []>} : vector<6x25xbf16>, vector<25x392xbf16>, vector<6x392xf32> -> vector<6x392xf32>
    %4 = vector.broadcast %1 : vector<6x1xf32> to vector<6x392xf32>
    %5 = arith.addf %3, %4 : vector<6x392xf32>
    %cst_5 = arith.constant 0.000000e+00 : f32
    %6 = vector.broadcast %cst_5 : f32 to vector<6x392xf32>
    %7 = arith.maximumf %5, %6 : vector<6x392xf32>
    %c0_6 = arith.constant 0 : index
    %c0_7 = arith.constant 0 : index
    %8 = vector.load %arg2[%c0_6, %c0_7] : memref<25x392xbf16, #tpu.memory_space<vmem>>, vector<25x392xbf16>
    %cst_8 = arith.constant dense<0.000000e+00> : vector<6x392xf32>
    %9 = tpu.matmul %0, %8, %cst_8 {dimension_numbers = #tpu.dot_dimension_numbers<[1], [0], [0], [1], [0, 0, 1, 1], [], []>} : vector<6x25xbf16>, vector<25x392xbf16>, vector<6x392xf32> -> vector<6x392xf32>
    %10 = vector.broadcast %1 : vector<6x1xf32> to vector<6x392xf32>
    %11 = arith.addf %9, %10 : vector<6x392xf32>
    %cst_9 = arith.constant 0.000000e+00 : f32
    %12 = vector.broadcast %cst_9 : f32 to vector<6x392xf32>
    %13 = arith.maximumf %11, %12 : vector<6x392xf32>
    %14 = arith.addf %7, %13 : vector<6x392xf32>
    %c0_10 = arith.constant 0 : index
    %c0_11 = arith.constant 0 : index
    %15 = vector.load %arg3[%c0_10, %c0_11] : memref<25x392xbf16, #tpu.memory_space<vmem>>, vector<25x392xbf16>
    %cst_12 = arith.constant dense<0.000000e+00> : vector<6x392xf32>
    %16 = tpu.matmul %0, %15, %cst_12 {dimension_numbers = #tpu.dot_dimension_numbers<[1], [0], [0], [1], [0, 0, 1, 1], [], []>} : vector<6x25xbf16>, vector<25x392xbf16>, vector<6x392xf32> -> vector<6x392xf32>
    %17 = vector.broadcast %1 : vector<6x1xf32> to vector<6x392xf32>
    %18 = arith.addf %16, %17 : vector<6x392xf32>
    %cst_13 = arith.constant 0.000000e+00 : f32
    %19 = vector.broadcast %cst_13 : f32 to vector<6x392xf32>
    %20 = arith.maximumf %18, %19 : vector<6x392xf32>
    %21 = arith.addf %14, %20 : vector<6x392xf32>
    %c0_14 = arith.constant 0 : index
    %c0_15 = arith.constant 0 : index
    %22 = vector.load %arg4[%c0_14, %c0_15] : memref<25x392xbf16, #tpu.memory_space<vmem>>, vector<25x392xbf16>
    %cst_16 = arith.constant dense<0.000000e+00> : vector<6x392xf32>
    %23 = tpu.matmul %0, %22, %cst_16 {dimension_numbers = #tpu.dot_dimension_numbers<[1], [0], [0], [1], [0, 0, 1, 1], [], []>} : vector<6x25xbf16>, vector<25x392xbf16>, vector<6x392xf32> -> vector<6x392xf32>
    %24 = vector.broadcast %1 : vector<6x1xf32> to vector<6x392xf32>
    %25 = arith.addf %23, %24 : vector<6x392xf32>
    %cst_17 = arith.constant 0.000000e+00 : f32
    %26 = vector.broadcast %cst_17 : f32 to vector<6x392xf32>
    %27 = arith.maximumf %25, %26 : vector<6x392xf32>
    %28 = arith.addf %21, %27 : vector<6x392xf32>
    %cst_18 = arith.constant 2.500000e-01 : f32
    %29 = vector.broadcast %cst_18 : f32 to vector<6x392xf32>
    %30 = arith.mulf %28, %29 : vector<6x392xf32>
    %31 = arith.truncf %30 : vector<6x392xf32> to vector<6x392xbf16>
    %c0_19 = arith.constant 0 : index
    %c0_20 = arith.constant 0 : index
    %32 = vector.load %arg7[%c0_19, %c0_20] : memref<6x392xbf16, #tpu.memory_space<vmem>>, vector<6x392xbf16>
    tpu.vector_store %arg7[%c0_19, %c0_20], %31 {strides = array<i32>} : memref<6x392xbf16, #tpu.memory_space<vmem>>, vector<6x392xbf16>,
    return
  }
  func.func @transform_0(%arg0: i32) -> (i32, i32) {
    %c0_i32 = arith.constant 0 : i32
    %c0_i32_0 = arith.constant 0 : i32
    return %c0_i32, %arg0 : i32, i32
  }
  func.func @transform_1(%arg0: i32) -> (i32, i32) {
    %c0_i32 = arith.constant 0 : i32
    %c0_i32_0 = arith.constant 0 : i32
    return %c0_i32, %arg0 : i32, i32
  }
  func.func @transform_2(%arg0: i32) -> (i32, i32) {
    %c0_i32 = arith.constant 0 : i32
    %c0_i32_0 = arith.constant 0 : i32
    return %c0_i32, %arg0 : i32, i32
  }
  func.func @transform_3(%arg0: i32) -> (i32, i32) {
    %c0_i32 = arith.constant 0 : i32
    %c0_i32_0 = arith.constant 0 : i32
    return %c0_i32, %arg0 : i32, i32
  }
  func.func @transform_4(%arg0: i32) -> (i32, i32) {
    %c0_i32 = arith.constant 0 : i32
    %c0_i32_0 = arith.constant 0 : i32
    %c0_i32_1 = arith.constant 0 : i32
    return %c0_i32, %c0_i32_0 : i32, i32
  }
  func.func @transform_5(%arg0: i32) -> (i32, i32) {
    %c0_i32 = arith.constant 0 : i32
    %c0_i32_0 = arith.constant 0 : i32
    %c0_i32_1 = arith.constant 0 : i32
    return %c0_i32, %c0_i32_0 : i32, i32
  }
  func.func @transform_6(%arg0: i32) -> (i32, i32) {
    %c0_i32 = arith.constant 0 : i32
    %c0_i32_0 = arith.constant 0 : i32
    return %c0_i32, %arg0 : i32, i32
  }
}

module attributes {stable_mosaic.version = 11 : i64} {
  func.func @_conv_relu_pool_kernel(%arg0: i32, %arg1: memref<150x50xbf16, #tpu.memory_space<vmem>>, %arg2: memref<150x50xbf16, #tpu.memory_space<vmem>>, %arg3: memref<150x50xbf16, #tpu.memory_space<vmem>>, %arg4: memref<150x50xbf16, #tpu.memory_space<vmem>>, %arg5: memref<16x150xbf16, #tpu.memory_space<vmem>>, %arg6: memref<16x1xf32, #tpu.memory_space<vmem>>, %arg7: memref<16x50xbf16, #tpu.memory_space<vmem>>) attributes {dimension_semantics = [#tpu.dimension_semantics<parallel>], iteration_bounds = array<i64: 1>, scalar_prefetch = 0 : i64, scratch_operands = 0 : i64, tpu.core_type = #tpu.core_type<tc>, window_params = [{transform_indices = @transform_0, window_bounds = array<i64: 150, 50>}, {transform_indices = @transform_1, window_bounds = array<i64: 150, 50>}, {transform_indices = @transform_2, window_bounds = array<i64: 150, 50>}, {transform_indices = @transform_3, window_bounds = array<i64: 150, 50>}, {pipeline_mode = #tpu.pipeline_mode<synchronous>, transform_indices = @transform_4, window_bounds = array<i64: 16, 150>}, {pipeline_mode = #tpu.pipeline_mode<synchronous>, transform_indices = @transform_5, window_bounds = array<i64: 16, 1>}, {transform_indices = @transform_6, window_bounds = array<i64: 16, 50>}]} {
    %c0 = arith.constant 0 : index
    %c0_0 = arith.constant 0 : index
    %0 = vector.load %arg5[%c0, %c0_0] : memref<16x150xbf16, #tpu.memory_space<vmem>>, vector<16x150xbf16>
    %c0_1 = arith.constant 0 : index
    %c0_2 = arith.constant 0 : index
    %1 = vector.load %arg6[%c0_1, %c0_2] : memref<16x1xf32, #tpu.memory_space<vmem>>, vector<16x1xf32>
    %c0_3 = arith.constant 0 : index
    %c0_4 = arith.constant 0 : index
    %2 = vector.load %arg1[%c0_3, %c0_4] : memref<150x50xbf16, #tpu.memory_space<vmem>>, vector<150x50xbf16>
    %cst = arith.constant dense<0.000000e+00> : vector<16x50xf32>
    %3 = tpu.matmul %0, %2, %cst {dimension_numbers = #tpu.dot_dimension_numbers<[1], [0], [0], [1], [0, 0, 1, 1], [], []>} : vector<16x150xbf16>, vector<150x50xbf16>, vector<16x50xf32> -> vector<16x50xf32>
    %4 = vector.broadcast %1 : vector<16x1xf32> to vector<16x50xf32>
    %5 = arith.addf %3, %4 : vector<16x50xf32>
    %cst_5 = arith.constant 0.000000e+00 : f32
    %6 = vector.broadcast %cst_5 : f32 to vector<16x50xf32>
    %7 = arith.maximumf %5, %6 : vector<16x50xf32>
    %c0_6 = arith.constant 0 : index
    %c0_7 = arith.constant 0 : index
    %8 = vector.load %arg2[%c0_6, %c0_7] : memref<150x50xbf16, #tpu.memory_space<vmem>>, vector<150x50xbf16>
    %cst_8 = arith.constant dense<0.000000e+00> : vector<16x50xf32>
    %9 = tpu.matmul %0, %8, %cst_8 {dimension_numbers = #tpu.dot_dimension_numbers<[1], [0], [0], [1], [0, 0, 1, 1], [], []>} : vector<16x150xbf16>, vector<150x50xbf16>, vector<16x50xf32> -> vector<16x50xf32>
    %10 = vector.broadcast %1 : vector<16x1xf32> to vector<16x50xf32>
    %11 = arith.addf %9, %10 : vector<16x50xf32>
    %cst_9 = arith.constant 0.000000e+00 : f32
    %12 = vector.broadcast %cst_9 : f32 to vector<16x50xf32>
    %13 = arith.maximumf %11, %12 : vector<16x50xf32>
    %14 = arith.addf %7, %13 : vector<16x50xf32>
    %c0_10 = arith.constant 0 : index
    %c0_11 = arith.constant 0 : index
    %15 = vector.load %arg3[%c0_10, %c0_11] : memref<150x50xbf16, #tpu.memory_space<vmem>>, vector<150x50xbf16>
    %cst_12 = arith.constant dense<0.000000e+00> : vector<16x50xf32>
    %16 = tpu.matmul %0, %15, %cst_12 {dimension_numbers = #tpu.dot_dimension_numbers<[1], [0], [0], [1], [0, 0, 1, 1], [], []>} : vector<16x150xbf16>, vector<150x50xbf16>, vector<16x50xf32> -> vector<16x50xf32>
    %17 = vector.broadcast %1 : vector<16x1xf32> to vector<16x50xf32>
    %18 = arith.addf %16, %17 : vector<16x50xf32>
    %cst_13 = arith.constant 0.000000e+00 : f32
    %19 = vector.broadcast %cst_13 : f32 to vector<16x50xf32>
    %20 = arith.maximumf %18, %19 : vector<16x50xf32>
    %21 = arith.addf %14, %20 : vector<16x50xf32>
    %c0_14 = arith.constant 0 : index
    %c0_15 = arith.constant 0 : index
    %22 = vector.load %arg4[%c0_14, %c0_15] : memref<150x50xbf16, #tpu.memory_space<vmem>>, vector<150x50xbf16>
    %cst_16 = arith.constant dense<0.000000e+00> : vector<16x50xf32>
    %23 = tpu.matmul %0, %22, %cst_16 {dimension_numbers = #tpu.dot_dimension_numbers<[1], [0], [0], [1], [0, 0, 1, 1], [], []>} : vector<16x150xbf16>, vector<150x50xbf16>, vector<16x50xf32> -> vector<16x50xf32>
    %24 = vector.broadcast %1 : vector<16x1xf32> to vector<16x50xf32>
    %25 = arith.addf %23, %24 : vector<16x50xf32>
    %cst_17 = arith.constant 0.000000e+00 : f32
    %26 = vector.broadcast %cst_17 : f32 to vector<16x50xf32>
    %27 = arith.maximumf %25, %26 : vector<16x50xf32>
    %28 = arith.addf %21, %27 : vector<16x50xf32>
    %cst_18 = arith.constant 2.500000e-01 : f32
    %29 = vector.broadcast %cst_18 : f32 to vector<16x50xf32>
    %30 = arith.mulf %28, %29 : vector<16x50xf32>
    %31 = arith.truncf %30 : vector<16x50xf32> to vector<16x50xbf16>
    %c0_19 = arith.constant 0 : index
    %c0_20 = arith.constant 0 : index
    %32 = vector.load %arg7[%c0_19, %c0_20] : memref<16x50xbf16, #tpu.memory_space<vmem>>, vector<16x50xbf16>
    tpu.vector_store %arg7[%c0_19, %c0_20], %31 {strides = array<i32>} : memref<16x50xbf16, #tpu.memory_space<vmem>>, vector<16x50xbf16>,
    return
  }
  func.func @transform_0(%arg0: i32) -> (i32, i32) {
    %c0_i32 = arith.constant 0 : i32
    %c0_i32_0 = arith.constant 0 : i32
    return %c0_i32, %arg0 : i32, i32
  }
  func.func @transform_1(%arg0: i32) -> (i32, i32) {
    %c0_i32 = arith.constant 0 : i32
    %c0_i32_0 = arith.constant 0 : i32
    return %c0_i32, %arg0 : i32, i32
  }
  func.func @transform_2(%arg0: i32) -> (i32, i32) {
    %c0_i32 = arith.constant 0 : i32
    %c0_i32_0 = arith.constant 0 : i32
    return %c0_i32, %arg0 : i32, i32
  }
  func.func @transform_3(%arg0: i32) -> (i32, i32) {
    %c0_i32 = arith.constant 0 : i32
    %c0_i32_0 = arith.constant 0 : i32
    return %c0_i32, %arg0 : i32, i32
  }
  func.func @transform_4(%arg0: i32) -> (i32, i32) {
    %c0_i32 = arith.constant 0 : i32
    %c0_i32_0 = arith.constant 0 : i32
    %c0_i32_1 = arith.constant 0 : i32
    return %c0_i32, %c0_i32_0 : i32, i32
  }
  func.func @transform_5(%arg0: i32) -> (i32, i32) {
    %c0_i32 = arith.constant 0 : i32
    %c0_i32_0 = arith.constant 0 : i32
    %c0_i32_1 = arith.constant 0 : i32
    return %c0_i32, %c0_i32_0 : i32, i32
  }
  func.func @transform_6(%arg0: i32) -> (i32, i32) {
    %c0_i32 = arith.constant 0 : i32
    %c0_i32_0 = arith.constant 0 : i32
    return %c0_i32, %arg0 : i32, i32
  }
}

module attributes {stable_mosaic.version = 11 : i64} {
  func.func @_fc_stack_kernel(%arg0: i32, %arg1: memref<2x400xbf16, #tpu.memory_space<vmem>>, %arg2: memref<400x120xbf16, #tpu.memory_space<vmem>>, %arg3: memref<1x120xf32, #tpu.memory_space<vmem>>, %arg4: memref<120x84xbf16, #tpu.memory_space<vmem>>, %arg5: memref<1x84xf32, #tpu.memory_space<vmem>>, %arg6: memref<84x10xbf16, #tpu.memory_space<vmem>>, %arg7: memref<1x10xf32, #tpu.memory_space<vmem>>, %arg8: memref<2x10xf32, #tpu.memory_space<vmem>>) attributes {dimension_semantics = [#tpu.dimension_semantics<parallel>], iteration_bounds = array<i64: 1>, scalar_prefetch = 0 : i64, scratch_operands = 0 : i64, tpu.core_type = #tpu.core_type<tc>, window_params = [{transform_indices = @transform_0, window_bounds = array<i64: 2, 400>}, {pipeline_mode = #tpu.pipeline_mode<synchronous>, transform_indices = @transform_1, window_bounds = array<i64: 400, 120>}, {pipeline_mode = #tpu.pipeline_mode<synchronous>, transform_indices = @transform_2, window_bounds = array<i64: 1, 120>}, {pipeline_mode = #tpu.pipeline_mode<synchronous>, transform_indices = @transform_3, window_bounds = array<i64: 120, 84>}, {pipeline_mode = #tpu.pipeline_mode<synchronous>, transform_indices = @transform_4, window_bounds = array<i64: 1, 84>}, {pipeline_mode = #tpu.pipeline_mode<synchronous>, transform_indices = @transform_5, window_bounds = array<i64: 84, 10>}, {pipeline_mode = #tpu.pipeline_mode<synchronous>, transform_indices = @transform_6, window_bounds = array<i64: 1, 10>}, {transform_indices = @transform_7, window_bounds = array<i64: 2, 10>}]} {
    %c0 = arith.constant 0 : index
    %c0_0 = arith.constant 0 : index
    %0 = vector.load %arg1[%c0, %c0_0] : memref<2x400xbf16, #tpu.memory_space<vmem>>, vector<2x400xbf16>
    %c0_1 = arith.constant 0 : index
    %c0_2 = arith.constant 0 : index
    %1 = vector.load %arg2[%c0_1, %c0_2] : memref<400x120xbf16, #tpu.memory_space<vmem>>, vector<400x120xbf16>
    %cst = arith.constant dense<0.000000e+00> : vector<2x120xf32>
    %2 = tpu.matmul %0, %1, %cst {dimension_numbers = #tpu.dot_dimension_numbers<[1], [0], [0], [1], [0, 0, 1, 1], [], []>} : vector<2x400xbf16>, vector<400x120xbf16>, vector<2x120xf32> -> vector<2x120xf32>
    %c0_3 = arith.constant 0 : index
    %c0_4 = arith.constant 0 : index
    %3 = vector.load %arg3[%c0_3, %c0_4] : memref<1x120xf32, #tpu.memory_space<vmem>>, vector<1x120xf32>
    %4 = vector.broadcast %3 : vector<1x120xf32> to vector<2x120xf32>
    %5 = arith.addf %2, %4 : vector<2x120xf32>
    %cst_5 = arith.constant 0.000000e+00 : f32
    %6 = vector.broadcast %cst_5 : f32 to vector<2x120xf32>
    %7 = arith.maximumf %5, %6 : vector<2x120xf32>
    %8 = arith.truncf %7 : vector<2x120xf32> to vector<2x120xbf16>
    %c0_6 = arith.constant 0 : index
    %c0_7 = arith.constant 0 : index
    %9 = vector.load %arg4[%c0_6, %c0_7] : memref<120x84xbf16, #tpu.memory_space<vmem>>, vector<120x84xbf16>
    %cst_8 = arith.constant dense<0.000000e+00> : vector<2x84xf32>
    %10 = tpu.matmul %8, %9, %cst_8 {dimension_numbers = #tpu.dot_dimension_numbers<[1], [0], [0], [1], [0, 0, 1, 1], [], []>} : vector<2x120xbf16>, vector<120x84xbf16>, vector<2x84xf32> -> vector<2x84xf32>
    %c0_9 = arith.constant 0 : index
    %c0_10 = arith.constant 0 : index
    %11 = vector.load %arg5[%c0_9, %c0_10] : memref<1x84xf32, #tpu.memory_space<vmem>>, vector<1x84xf32>
    %12 = vector.broadcast %11 : vector<1x84xf32> to vector<2x84xf32>
    %13 = arith.addf %10, %12 : vector<2x84xf32>
    %cst_11 = arith.constant 0.000000e+00 : f32
    %14 = vector.broadcast %cst_11 : f32 to vector<2x84xf32>
    %15 = arith.maximumf %13, %14 : vector<2x84xf32>
    %16 = arith.truncf %15 : vector<2x84xf32> to vector<2x84xbf16>
    %c0_12 = arith.constant 0 : index
    %c0_13 = arith.constant 0 : index
    %17 = vector.load %arg6[%c0_12, %c0_13] : memref<84x10xbf16, #tpu.memory_space<vmem>>, vector<84x10xbf16>
    %cst_14 = arith.constant dense<0.000000e+00> : vector<2x10xf32>
    %18 = tpu.matmul %16, %17, %cst_14 {dimension_numbers = #tpu.dot_dimension_numbers<[1], [0], [0], [1], [0, 0, 1, 1], [], []>} : vector<2x84xbf16>, vector<84x10xbf16>, vector<2x10xf32> -> vector<2x10xf32>
    %c0_15 = arith.constant 0 : index
    %c0_16 = arith.constant 0 : index
    %19 = vector.load %arg7[%c0_15, %c0_16] : memref<1x10xf32, #tpu.memory_space<vmem>>, vector<1x10xf32>
    %20 = vector.broadcast %19 : vector<1x10xf32> to vector<2x10xf32>
    %21 = arith.addf %18, %20 : vector<2x10xf32>
    %cst_17 = arith.constant 0.000000e+00 : f32
    %22 = vector.broadcast %cst_17 : f32 to vector<2x10xf32>
    %23 = arith.maximumf %21, %22 : vector<2x10xf32>
    %cst_18 = arith.constant dense<0xFF800000> : vector<2xf32>
    %24 = vector.multi_reduction <maximumf>, %23, %cst_18 [1] : vector<2x10xf32> to vector<2xf32>
    %25 = vector.shape_cast %24 : vector<2xf32> to vector<2x1xf32>
    %26 = vector.broadcast %25 : vector<2x1xf32> to vector<2x10xf32>
    %27 = arith.subf %23, %26 : vector<2x10xf32>
    %28 = math.exp %27 : vector<2x10xf32>
    %cst_19 = arith.constant dense<0.000000e+00> : vector<2xf32>
    %29 = vector.multi_reduction <add>, %28, %cst_19 [1] : vector<2x10xf32> to vector<2xf32>
    %30 = vector.shape_cast %29 : vector<2xf32> to vector<2x1xf32>
    %31 = tpu.reciprocal %30 {approx = true} : vector<2x1xf32> -> vector<2x1xf32>
    %32 = vector.broadcast %31 : vector<2x1xf32> to vector<2x10xf32>
    %33 = arith.mulf %28, %32 : vector<2x10xf32>
    %c0_20 = arith.constant 0 : index
    %c0_21 = arith.constant 0 : index
    %34 = vector.load %arg8[%c0_20, %c0_21] : memref<2x10xf32, #tpu.memory_space<vmem>>, vector<2x10xf32>
    tpu.vector_store %arg8[%c0_20, %c0_21], %33 {strides = array<i32>} : memref<2x10xf32, #tpu.memory_space<vmem>>, vector<2x10xf32>,
    return
  }
  func.func @transform_0(%arg0: i32) -> (i32, i32) {
    %c0_i32 = arith.constant 0 : i32
    %c0_i32_0 = arith.constant 0 : i32
    return %arg0, %c0_i32 : i32, i32
  }
  func.func @transform_1(%arg0: i32) -> (i32, i32) {
    %c0_i32 = arith.constant 0 : i32
    %c0_i32_0 = arith.constant 0 : i32
    %c0_i32_1 = arith.constant 0 : i32
    return %c0_i32, %c0_i32_0 : i32, i32
  }
  func.func @transform_2(%arg0: i32) -> (i32, i32) {
    %c0_i32 = arith.constant 0 : i32
    %c0_i32_0 = arith.constant 0 : i32
    %c0_i32_1 = arith.constant 0 : i32
    return %c0_i32, %c0_i32_0 : i32, i32
  }
  func.func @transform_3(%arg0: i32) -> (i32, i32) {
    %c0_i32 = arith.constant 0 : i32
    %c0_i32_0 = arith.constant 0 : i32
    %c0_i32_1 = arith.constant 0 : i32
    return %c0_i32, %c0_i32_0 : i32, i32
  }
  func.func @transform_4(%arg0: i32) -> (i32, i32) {
    %c0_i32 = arith.constant 0 : i32
    %c0_i32_0 = arith.constant 0 : i32
    %c0_i32_1 = arith.constant 0 : i32
    return %c0_i32, %c0_i32_0 : i32, i32
  }
  func.func @transform_5(%arg0: i32) -> (i32, i32) {
    %c0_i32 = arith.constant 0 : i32
    %c0_i32_0 = arith.constant 0 : i32
    %c0_i32_1 = arith.constant 0 : i32
    return %c0_i32, %c0_i32_0 : i32, i32
  }
  func.func @transform_6(%arg0: i32) -> (i32, i32) {
    %c0_i32 = arith.constant 0 : i32
    %c0_i32_0 = arith.constant 0 : i32
    %c0_i32_1 = arith.constant 0 : i32
    return %c0_i32, %c0_i32_0 : i32, i32
  }
  func.func @transform_7(%arg0: i32) -> (i32, i32) {
    %c0_i32 = arith.constant 0 : i32
    %c0_i32_0 = arith.constant 0 : i32
    return %arg0, %c0_i32 : i32, i32
  }
}

</mosaic_0001>

<llo_original>
// kernel: lenet_forward.3
$region0: #{lenet_forward.3}
  #allocation0 [shape = 'u32[]', space=smem, size = 0x4, offset = 0x4, fixed_abs, tag = 'smem constant byte address 0x4 - core index']
  #allocation1 [shape = 'u32[72,128]{1,0:T(1,128)}', space=vmem, size = 0x9000, scoped, tag = 'internal scratch']
  %s0 = inlined_call_operand.vmem [shape: bf16[25,392], index: 0, kind: input, shape index: {}]
  %s1 = inlined_call_operand.vmem [shape: bf16[25,392], index: 1, kind: input, shape index: {}]
  %s2 = inlined_call_operand.vmem [shape: bf16[25,392], index: 2, kind: input, shape index: {}]
  %s3 = inlined_call_operand.vmem [shape: bf16[25,392], index: 3, kind: input, shape index: {}]
  %s4 = inlined_call_operand.vmem [shape: bf16[6,25], index: 4, kind: input, shape index: {}]
  %s5 = inlined_call_operand.vmem [shape: f32[6,1], index: 5, kind: input, shape index: {}]
  %s6 = inlined_call_operand.vmem [shape: bf16[6,392], index: 6, kind: output, shape index: {}]
  %s7 = sld [smem:[#allocation0]]
  $region34: #{lenet_forward.3} parent=0
    _
  %s9 = ssub.s32 1, %s7
  %s10 = scalar_select 0, %s9, %s7
  // Predicated region
  $region2: #{lenet_forward.3} parent=0 // pred_check
    _
  $region3: #{lenet_forward.3} parent=0 // pred_check_branch
    %12 = sbr.rel (0) target = $region5
  $region4: #{lenet_forward.3} parent=0 // pred_region
    _
  $region5: #{lenet_forward.3} parent=0 // pred_fallthru
    _
  // Predicated region
  $region6: #{lenet_forward.3} parent=0 // pred_check
    _
  $region7: #{lenet_forward.3} parent=0 // pred_check_branch
    %14 = sbr.rel (0) target = $region9
  $region8: #{lenet_forward.3} parent=0 // pred_region
    _
  $region9: #{lenet_forward.3} parent=0 // pred_fallthru
    _
  // Predicated region
  $region10: #{lenet_forward.3} parent=0 // pred_check
    _
  $region11: #{lenet_forward.3} parent=0 // pred_check_branch
    %16 = sbr.rel (0) target = $region13
  $region12: #{lenet_forward.3} parent=0 // pred_region
    _
  $region13: #{lenet_forward.3} parent=0 // pred_fallthru
    _
  // Predicated region
  $region14: #{lenet_forward.3} parent=0 // pred_check
    _
  $region15: #{lenet_forward.3} parent=0 // pred_check_branch
    %18 = sbr.rel (0) target = $region17
  $region16: #{lenet_forward.3} parent=0 // pred_region
    _
  $region17: #{lenet_forward.3} parent=0 // pred_fallthru
    _
  // Predicated region
  $region18: #{lenet_forward.3} parent=0 // pred_check
    _
  $region19: #{lenet_forward.3} parent=0 // pred_check_branch
    %20 = sbr.rel (0) target = $region21
  $region20: #{lenet_forward.3} parent=0 // pred_region
    _
  $region21: #{lenet_forward.3} parent=0 // pred_fallthru
    _
  // Predicated region
  $region22: #{lenet_forward.3} parent=0 // pred_check
    _
  $region23: #{lenet_forward.3} parent=0 // pred_check_branch
    %22 = sbr.rel (0) target = $region25
  $region24: #{lenet_forward.3} parent=0 // pred_region
    _
  $region25: #{lenet_forward.3} parent=0 // pred_fallthru
    _
  %v24 = vld [vmem:[%s4] sm:$0x7]
  %v25 = vld [vmem:[%s5] sm:$0x3f]
  %v26 = vld [vmem:[%s0] sm:$0xff]
  %v27 = vld [vmem:[%s0 + $0x8] sm:$0xff]
  %v28 = vld [vmem:[%s0 + $0x10] sm:$0xff]
  %v29 = vld [vmem:[%s0 + $0x18] sm:$0xff]
  %v30 = vld [vmem:[%s0 + $0x20] sm:$0xff]
  %v31 = vld [vmem:[%s0 + $0x28] sm:$0xff]
  %v32 = vld [vmem:[%s0 + $0x30] sm:$0x11]
  %v33 = vld [vmem:[%s0 + $0x38] sm:$0x11]
  %35 = vset.pattern.permute.xlu0 0
  %36 = vperm.xlu0 %35, %v25
  %v37 = vpop.permute.xlu0 %36
  %v47 = vunpack.c.l.b16 %v26
  %v48 = vunpack.c.h.b16 %v26
  %v49 = vunpack.c.l.b16 %v27
  %v50 = vunpack.c.h.b16 %v27
  %v51 = vunpack.c.l.b16 %v28
  %v52 = vunpack.c.h.b16 %v28
  %v53 = vunpack.c.l.b16 %v29
  %v54 = vunpack.c.h.b16 %v29
  %v55 = vunpack.c.l.b16 %v30
  %v56 = vunpack.c.h.b16 %v30
  %v57 = vunpack.c.l.b16 %v31
  %v58 = vunpack.c.h.b16 %v31
  %v59 = vunpack.c.l.b16 %v32
  %v60 = vunpack.c.h.b16 %v32
  %v61 = vunpack.c.l.b16 %v33
  %v62 = vunpack.c.h.b16 %v33
  %v63 = vpack.c.b16 %v51, %v47
  %v64 = vpack.c.b16 %v52, %v48
  %v65 = vpack.c.b16 %v53, %v49
  %v66 = vpack.c.b16 %v54, %v50
  %v67 = vpack.c.b16 %v59, %v55
  %v68 = vpack.c.b16 %v60, %v56
  %v69 = vpack.c.b16 %v61, %v57
  %v70 = vpack.c.b16 %v62, %v58
  %vm75 = vcmask 203776
  %v77 = vsel %vm75, %v24, 0
  %vm79 = vcmask 1043456
  %vm80 = vcmask 1044480
  %v81 = vsel %vm79, 4294967295, 65535
  %v82 = vsel %vm80, %v81, 0
  %v84 = vand.u32 %v67, %v82
  %v87 = vand.u32 %v68, %v82
  %v90 = vand.u32 %v69, %v82
  %v93 = vand.u32 %v70, %v82
  %95 = vmatpush.bf16.msra.mxu0 0
  %96 = vmatpush.bf16.msra.mxu0 0
  %97 = vmatpush.bf16.msra.mxu0 0
  %98 = vmatpush.bf16.msra.mxu0 0
  %99 = vmatpush.bf16.msra.mxu0 0
  %100 = vmatpush.bf16.msra.mxu0 0
  %101 = vmatpush.bf16.msra.mxu0 %v84
  %102 = vmatpush.bf16.msra.mxu0 %v63
  %103 = vmatmul.bf16.gmra.mxu0 %v77
  %v104 = vpop.f32.mrf.mxu0
  %v105 = vadd.f32 %v37, %v104
  %v106 = vpop.f32.mrf.mxu0
  %107 = vdwg.mxu0
  %108 = vmatpush.bf16.msra.mxu0 0
  %109 = vmatpush.bf16.msra.mxu0 0
  %110 = vmatpush.bf16.msra.mxu0 0
  %111 = vmatpush.bf16.msra.mxu0 0
  %112 = vmatpush.bf16.msra.mxu0 0
  %113 = vmatpush.bf16.msra.mxu0 0
  %114 = vmatpush.bf16.msra.mxu0 %v87
  %115 = vmatpush.bf16.msra.mxu0 %v64
  %116 = vmatmul.bf16.gmra.mxu0 %v77
  %v117 = vpop.f32.mrf.mxu0
  %v118 = vadd.f32 %v37, %v117
  %v119 = vpop.f32.mrf.mxu0
  %120 = vdwg.mxu0
  %121 = vmatpush.bf16.msra.mxu0 0
  %122 = vmatpush.bf16.msra.mxu0 0
  %123 = vmatpush.bf16.msra.mxu0 0
  %124 = vmatpush.bf16.msra.mxu0 0
  %125 = vmatpush.bf16.msra.mxu0 0
  %126 = vmatpush.bf16.msra.mxu0 0
  %127 = vmatpush.bf16.msra.mxu0 %v90
  %128 = vmatpush.bf16.msra.mxu0 %v65
  %129 = vmatmul.bf16.gmra.mxu0 %v77
  %v130 = vpop.f32.mrf.mxu0
  %v131 = vadd.f32 %v37, %v130
  %v132 = vpop.f32.mrf.mxu0
  %133 = vdwg.mxu0
  %134 = vmatpush.bf16.msra.mxu0 0
  %135 = vmatpush.bf16.msra.mxu0 0
  %136 = vmatpush.bf16.msra.mxu0 0
  %137 = vmatpush.bf16.msra.mxu0 0
  %138 = vmatpush.bf16.msra.mxu0 0
  %139 = vmatpush.bf16.msra.mxu0 0
  %140 = vmatpush.bf16.msra.mxu0 %v93
  %141 = vmatpush.bf16.msra.mxu0 %v66
  %142 = vmatmul.bf16.gmra.mxu0 %v77
  %v143 = vpop.f32.mrf.mxu0
  %v144 = vadd.f32 %v37, %v143
  %v145 = vpop.f32.mrf.mxu0
  %146 = vdwg.mxu0
  %v147 = vmax.f32 %v105, 0.0
  %v148 = vmax.f32 %v118, 0.0
  %v149 = vmax.f32 %v131, 0.0
  %v150 = vmax.f32 %v144, 0.0
  %v151 = vld [vmem:[%s1] sm:$0xff]
  %v152 = vld [vmem:[%s1 + $0x8] sm:$0xff]
  %v153 = vld [vmem:[%s1 + $0x10] sm:$0xff]
  %v154 = vld [vmem:[%s1 + $0x18] sm:$0xff]
  %v155 = vld [vmem:[%s1 + $0x20] sm:$0xff]
  %v156 = vld [vmem:[%s1 + $0x28] sm:$0xff]
  %v157 = vld [vmem:[%s1 + $0x30] sm:$0x11]
  %v158 = vld [vmem:[%s1 + $0x38] sm:$0x11]
  %v167 = vunpack.c.l.b16 %v151
  %v168 = vunpack.c.h.b16 %v151
  %v169 = vunpack.c.l.b16 %v152
  %v170 = vunpack.c.h.b16 %v152
  %v171 = vunpack.c.l.b16 %v153
  %v172 = vunpack.c.h.b16 %v153
  %v173 = vunpack.c.l.b16 %v154
  %v174 = vunpack.c.h.b16 %v154
  %v175 = vunpack.c.l.b16 %v155
  %v176 = vunpack.c.h.b16 %v155
  %v177 = vunpack.c.l.b16 %v156
  %v178 = vunpack.c.h.b16 %v156
  %v179 = vunpack.c.l.b16 %v157
  %v180 = vunpack.c.h.b16 %v157
  %v181 = vunpack.c.l.b16 %v158
  %v182 = vunpack.c.h.b16 %v158
  %v183 = vpack.c.b16 %v171, %v167
  %v184 = vpack.c.b16 %v172, %v168
  %v185 = vpack.c.b16 %v173, %v169
  %v186 = vpack.c.b16 %v174, %v170
  %v187 = vpack.c.b16 %v179, %v175
  %v188 = vpack.c.b16 %v180, %v176
  %v189 = vpack.c.b16 %v181, %v177
  %v190 = vpack.c.b16 %v182, %v178
  %v196 = vand.u32 %v187, %v82
  %v199 = vand.u32 %v188, %v82
  %v202 = vand.u32 %v189, %v82
  %v205 = vand.u32 %v190, %v82
  %207 = vmatpush.bf16.msra.mxu0 0
  %208 = vmatpush.bf16.msra.mxu0 0
  %209 = vmatpush.bf16.msra.mxu0 0
  %210 = vmatpush.bf16.msra.mxu0 0
  %211 = vmatpush.bf16.msra.mxu0 0
  %212 = vmatpush.bf16.msra.mxu0 0
  %213 = vmatpush.bf16.msra.mxu0 %v196
  %214 = vmatpush.bf16.msra.mxu0 %v183
  %215 = vmatmul.bf16.gmra.mxu0 %v77
  %v216 = vpop.f32.mrf.mxu0
  %v217 = vadd.f32 %v37, %v216
  %v218 = vpop.f32.mrf.mxu0
  %219 = vdwg.mxu0
  %220 = vmatpush.bf16.msra.mxu0 0
  %221 = vmatpush.bf16.msra.mxu0 0
  %222 = vmatpush.bf16.msra.mxu0 0
  %223 = vmatpush.bf16.msra.mxu0 0
  %224 = vmatpush.bf16.msra.mxu0 0
  %225 = vmatpush.bf16.msra.mxu0 0
  %226 = vmatpush.bf16.msra.mxu0 %v199
  %227 = vmatpush.bf16.msra.mxu0 %v184
  %228 = vmatmul.bf16.gmra.mxu0 %v77
  %v229 = vpop.f32.mrf.mxu0
  %v230 = vadd.f32 %v37, %v229
  %v231 = vpop.f32.mrf.mxu0
  %232 = vdwg.mxu0
  %233 = vmatpush.bf16.msra.mxu0 0
  %234 = vmatpush.bf16.msra.mxu0 0
  %235 = vmatpush.bf16.msra.mxu0 0
  %236 = vmatpush.bf16.msra.mxu0 0
  %237 = vmatpush.bf16.msra.mxu0 0
  %238 = vmatpush.bf16.msra.mxu0 0
  %239 = vmatpush.bf16.msra.mxu0 %v202
  %240 = vmatpush.bf16.msra.mxu0 %v185
  %241 = vmatmul.bf16.gmra.mxu0 %v77
  %v242 = vpop.f32.mrf.mxu0
  %v243 = vadd.f32 %v37, %v242
  %v244 = vpop.f32.mrf.mxu0
  %245 = vdwg.mxu0
  %246 = vmatpush.bf16.msra.mxu0 0
  %247 = vmatpush.bf16.msra.mxu0 0
  %248 = vmatpush.bf16.msra.mxu0 0
  %249 = vmatpush.bf16.msra.mxu0 0
  %250 = vmatpush.bf16.msra.mxu0 0
  %251 = vmatpush.bf16.msra.mxu0 0
  %252 = vmatpush.bf16.msra.mxu0 %v205
  %253 = vmatpush.bf16.msra.mxu0 %v186
  %254 = vmatmul.bf16.gmra.mxu0 %v77
  %v255 = vpop.f32.mrf.mxu0
  %v256 = vadd.f32 %v37, %v255
  %v257 = vpop.f32.mrf.mxu0
  %258 = vdwg.mxu0
  %v259 = vmax.f32 %v217, 0.0
  %v260 = vmax.f32 %v230, 0.0
  %v261 = vmax.f32 %v243, 0.0
  %v262 = vmax.f32 %v256, 0.0
  %v263 = vadd.f32 %v147, %v259
  %v264 = vadd.f32 %v148, %v260
  %v265 = vadd.f32 %v149, %v261
  %v266 = vadd.f32 %v150, %v262
  %v267 = vld [vmem:[%s2] sm:$0xff]
  %v268 = vld [vmem:[%s2 + $0x8] sm:$0xff]
  %v269 = vld [vmem:[%s2 + $0x10] sm:$0xff]
  %v270 = vld [vmem:[%s2 + $0x18] sm:$0xff]
  %v271 = vld [vmem:[%s2 + $0x20] sm:$0xff]
  %v272 = vld [vmem:[%s2 + $0x28] sm:$0xff]
  %v273 = vld [vmem:[%s2 + $0x30] sm:$0x11]
  %v274 = vld [vmem:[%s2 + $0x38] sm:$0x11]
  %v283 = vunpack.c.l.b16 %v267
  %v284 = vunpack.c.h.b16 %v267
  %v285 = vunpack.c.l.b16 %v268
  %v286 = vunpack.c.h.b16 %v268
  %v287 = vunpack.c.l.b16 %v269
  %v288 = vunpack.c.h.b16 %v269
  %v289 = vunpack.c.l.b16 %v270
  %v290 = vunpack.c.h.b16 %v270
  %v291 = vunpack.c.l.b16 %v271
  %v292 = vunpack.c.h.b16 %v271
  %v293 = vunpack.c.l.b16 %v272
  %v294 = vunpack.c.h.b16 %v272
  %v295 = vunpack.c.l.b16 %v273
  %v296 = vunpack.c.h.b16 %v273
  %v297 = vunpack.c.l.b16 %v274
  %v298 = vunpack.c.h.b16 %v274
  %v299 = vpack.c.b16 %v287, %v283
  %v300 = vpack.c.b16 %v288, %v284
  %v301 = vpack.c.b16 %v289, %v285
  %v302 = vpack.c.b16 %v290, %v286
  %v303 = vpack.c.b16 %v295, %v291
  %v304 = vpack.c.b16 %v296, %v292
  %v305 = vpack.c.b16 %v297, %v293
  %v306 = vpack.c.b16 %v298, %v294
  %v312 = vand.u32 %v303, %v82
  %v315 = vand.u32 %v304, %v82
  %v318 = vand.u32 %v305, %v82
  %v321 = vand.u32 %v306, %v82
  %323 = vmatpush.bf16.msra.mxu0 0
  %324 = vmatpush.bf16.msra.mxu0 0
  %325 = vmatpush.bf16.msra.mxu0 0
  %326 = vmatpush.bf16.msra.mxu0 0
  %327 = vmatpush.bf16.msra.mxu0 0
  %328 = vmatpush.bf16.msra.mxu0 0
  %329 = vmatpush.bf16.msra.mxu0 %v312
  %330 = vmatpush.bf16.msra.mxu0 %v299
  %331 = vmatmul.bf16.gmra.mxu0 %v77
  %v332 = vpop.f32.mrf.mxu0
  %v333 = vadd.f32 %v37, %v332
  %v334 = vpop.f32.mrf.mxu0
  %335 = vdwg.mxu0
  %336 = vmatpush.bf16.msra.mxu0 0
  %337 = vmatpush.bf16.msra.mxu0 0
  %338 = vmatpush.bf16.msra.mxu0 0
  %339 = vmatpush.bf16.msra.mxu0 0
  %340 = vmatpush.bf16.msra.mxu0 0
  %341 = vmatpush.bf16.msra.mxu0 0
  %342 = vmatpush.bf16.msra.mxu0 %v315
  %343 = vmatpush.bf16.msra.mxu0 %v300
  %344 = vmatmul.bf16.gmra.mxu0 %v77
  %v345 = vpop.f32.mrf.mxu0
  %v346 = vadd.f32 %v37, %v345
  %v347 = vpop.f32.mrf.mxu0
  %348 = vdwg.mxu0
  %349 = vmatpush.bf16.msra.mxu0 0
  %350 = vmatpush.bf16.msra.mxu0 0
  %351 = vmatpush.bf16.msra.mxu0 0
  %352 = vmatpush.bf16.msra.mxu0 0
  %353 = vmatpush.bf16.msra.mxu0 0
  %354 = vmatpush.bf16.msra.mxu0 0
  %355 = vmatpush.bf16.msra.mxu0 %v318
  %356 = vmatpush.bf16.msra.mxu0 %v301
  %357 = vmatmul.bf16.gmra.mxu0 %v77
  %v358 = vpop.f32.mrf.mxu0
  %v359 = vadd.f32 %v37, %v358
  %v360 = vpop.f32.mrf.mxu0
  %361 = vdwg.mxu0
  %362 = vmatpush.bf16.msra.mxu0 0
  %363 = vmatpush.bf16.msra.mxu0 0
  %364 = vmatpush.bf16.msra.mxu0 0
  %365 = vmatpush.bf16.msra.mxu0 0
  %366 = vmatpush.bf16.msra.mxu0 0
  %367 = vmatpush.bf16.msra.mxu0 0
  %368 = vmatpush.bf16.msra.mxu0 %v321
  %369 = vmatpush.bf16.msra.mxu0 %v302
  %370 = vmatmul.bf16.gmra.mxu0 %v77
  %v371 = vpop.f32.mrf.mxu0
  %v372 = vadd.f32 %v37, %v371
  %v373 = vpop.f32.mrf.mxu0
  %374 = vdwg.mxu0
  %v375 = vmax.f32 %v333, 0.0
  %v376 = vmax.f32 %v346, 0.0
  %v377 = vmax.f32 %v359, 0.0
  %v378 = vmax.f32 %v372, 0.0
  %v379 = vadd.f32 %v263, %v375
  %v380 = vadd.f32 %v264, %v376
  %v381 = vadd.f32 %v265, %v377
  %v382 = vadd.f32 %v266, %v378
  %v383 = vld [vmem:[%s3] sm:$0xff]
  %v384 = vld [vmem:[%s3 + $0x8] sm:$0xff]
  %v385 = vld [vmem:[%s3 + $0x10] sm:$0xff]
  %v386 = vld [vmem:[%s3 + $0x18] sm:$0xff]
  %v387 = vld [vmem:[%s3 + $0x20] sm:$0xff]
  %v388 = vld [vmem:[%s3 + $0x28] sm:$0xff]
  %v389 = vld [vmem:[%s3 + $0x30] sm:$0x11]
  %v390 = vld [vmem:[%s3 + $0x38] sm:$0x11]
  %v399 = vunpack.c.l.b16 %v383
  %v400 = vunpack.c.h.b16 %v383
  %v401 = vunpack.c.l.b16 %v384
  %v402 = vunpack.c.h.b16 %v384
  %v403 = vunpack.c.l.b16 %v385
  %v404 = vunpack.c.h.b16 %v385
  %v405 = vunpack.c.l.b16 %v386
  %v406 = vunpack.c.h.b16 %v386
  %v407 = vunpack.c.l.b16 %v387
  %v408 = vunpack.c.h.b16 %v387
  %v409 = vunpack.c.l.b16 %v388
  %v410 = vunpack.c.h.b16 %v388
  %v411 = vunpack.c.l.b16 %v389
  %v412 = vunpack.c.h.b16 %v389
  %v413 = vunpack.c.l.b16 %v390
  %v414 = vunpack.c.h.b16 %v390
  %v415 = vpack.c.b16 %v403, %v399
  %v416 = vpack.c.b16 %v404, %v400
  %v417 = vpack.c.b16 %v405, %v401
  %v418 = vpack.c.b16 %v406, %v402
  %v419 = vpack.c.b16 %v411, %v407
  %v420 = vpack.c.b16 %v412, %v408
  %v421 = vpack.c.b16 %v413, %v409
  %v422 = vpack.c.b16 %v414, %v410
  %v428 = vand.u32 %v419, %v82
  %v431 = vand.u32 %v420, %v82
  %v434 = vand.u32 %v421, %v82
  %v437 = vand.u32 %v422, %v82
  %439 = vmatpush.bf16.msra.mxu0 0
  %440 = vmatpush.bf16.msra.mxu0 0
  %441 = vmatpush.bf16.msra.mxu0 0
  %442 = vmatpush.bf16.msra.mxu0 0
  %443 = vmatpush.bf16.msra.mxu0 0
  %444 = vmatpush.bf16.msra.mxu0 0
  %445 = vmatpush.bf16.msra.mxu0 %v428
  %446 = vmatpush.bf16.msra.mxu0 %v415
  %447 = vmatmul.bf16.gmra.mxu0 %v77
  %v448 = vpop.f32.mrf.mxu0
  %v449 = vadd.f32 %v37, %v448
  %v450 = vpop.f32.mrf.mxu0
  %451 = vdwg.mxu0
  %452 = vmatpush.bf16.msra.mxu0 0
  %453 = vmatpush.bf16.msra.mxu0 0
  %454 = vmatpush.bf16.msra.mxu0 0
  %455 = vmatpush.bf16.msra.mxu0 0
  %456 = vmatpush.bf16.msra.mxu0 0
  %457 = vmatpush.bf16.msra.mxu0 0
  %458 = vmatpush.bf16.msra.mxu0 %v431
  %459 = vmatpush.bf16.msra.mxu0 %v416
  %460 = vmatmul.bf16.gmra.mxu0 %v77
  %v461 = vpop.f32.mrf.mxu0
  %v462 = vadd.f32 %v37, %v461
  %v463 = vpop.f32.mrf.mxu0
  %464 = vdwg.mxu0
  %465 = vmatpush.bf16.msra.mxu0 0
  %466 = vmatpush.bf16.msra.mxu0 0
  %467 = vmatpush.bf16.msra.mxu0 0
  %468 = vmatpush.bf16.msra.mxu0 0
  %469 = vmatpush.bf16.msra.mxu0 0
  %470 = vmatpush.bf16.msra.mxu0 0
  %471 = vmatpush.bf16.msra.mxu0 %v434
  %472 = vmatpush.bf16.msra.mxu0 %v417
  %473 = vmatmul.bf16.gmra.mxu0 %v77
  %v474 = vpop.f32.mrf.mxu0
  %v475 = vadd.f32 %v37, %v474
  %v476 = vpop.f32.mrf.mxu0
  %477 = vdwg.mxu0
  %478 = vmatpush.bf16.msra.mxu0 0
  %479 = vmatpush.bf16.msra.mxu0 0
  %480 = vmatpush.bf16.msra.mxu0 0
  %481 = vmatpush.bf16.msra.mxu0 0
  %482 = vmatpush.bf16.msra.mxu0 0
  %483 = vmatpush.bf16.msra.mxu0 0
  %484 = vmatpush.bf16.msra.mxu0 %v437
  %485 = vmatpush.bf16.msra.mxu0 %v418
  %486 = vmatmul.bf16.gmra.mxu0 %v77
  %v487 = vpop.f32.mrf.mxu0
  %v488 = vadd.f32 %v37, %v487
  %v489 = vpop.f32.mrf.mxu0
  %490 = vdwg.mxu0
  %v491 = vmax.f32 %v449, 0.0
  %v492 = vmax.f32 %v462, 0.0
  %v493 = vmax.f32 %v475, 0.0
  %v494 = vmax.f32 %v488, 0.0
  %v495 = vadd.f32 %v379, %v491
  %v496 = vadd.f32 %v380, %v492
  %v497 = vadd.f32 %v381, %v493
  %v498 = vadd.f32 %v382, %v494
  %v499 = vmul.f32 %v495, 0.25
  %v500 = vmul.f32 %v496, 0.25
  %v501 = vmul.f32 %v497, 0.25
  %v502 = vmul.f32 %v498, 0.25
  %v503 = vpack.c.bf16 %v500, %v499
  %v504 = vpack.c.bf16 %v502, %v501
  %505 = vst [vmem:[%s6] sm:$0x77] %v503
  %vm506 = vcmask 1042432
  %vm507 = vcmask 63492
  %vm508 = vmor %vm507, %vm506
  %509 = vst.msk [vmem:[%s6 + $0x8] sm:$0x77] %vm508, %v504
  // Predicated region
  $region26: #{lenet_forward.3} parent=0 // pred_check
    _
  $region27: #{lenet_forward.3} parent=0 // pred_check_branch
    %511 = sbr.rel (0) target = $region29
  $region28: #{lenet_forward.3} parent=0 // pred_region
    _
  $region29: #{lenet_forward.3} parent=0 // pred_fallthru
    _
  // Predicated region
  $region30: #{lenet_forward.3} parent=0 // pred_check
    _
  $region31: #{lenet_forward.3} parent=0 // pred_check_branch
    %513 = sbr.rel (0) target = $region33
  $region32: #{lenet_forward.3} parent=0 // pred_region
    _
  $region33: #{lenet_forward.3} parent=0 // pred_fallthru
    _

// kernel: lenet_forward.4
$region0: #{lenet_forward.4}
  #allocation0 [shape = 'u32[]', space=smem, size = 0x4, offset = 0x4, fixed_abs, tag = 'smem constant byte address 0x4 - core index']
  #allocation1 [shape = 'u32[72,128]{1,0:T(1,128)}', space=vmem, size = 0x9000, scoped, tag = 'internal scratch']
  %s0 = inlined_call_operand.vmem [shape: bf16[150,50], index: 0, kind: input, shape index: {}]
  %s1 = inlined_call_operand.vmem [shape: bf16[150,50], index: 1, kind: input, shape index: {}]
  %s2 = inlined_call_operand.vmem [shape: bf16[150,50], index: 2, kind: input, shape index: {}]
  %s3 = inlined_call_operand.vmem [shape: bf16[150,50], index: 3, kind: input, shape index: {}]
  %s4 = inlined_call_operand.vmem [shape: bf16[16,150], index: 4, kind: input, shape index: {}]
  %s5 = inlined_call_operand.vmem [shape: f32[16,1], index: 5, kind: input, shape index: {}]
  %s6 = inlined_call_operand.vmem [shape: bf16[16,50], index: 6, kind: output, shape index: {}]
  %s7 = sld [smem:[#allocation0]]
  $region34: #{lenet_forward.4} parent=0
    _
  %s9 = ssub.s32 1, %s7
  %s10 = scalar_select 0, %s9, %s7
  // Predicated region
  $region2: #{lenet_forward.4} parent=0 // pred_check
    _
  $region3: #{lenet_forward.4} parent=0 // pred_check_branch
    %12 = sbr.rel (0) target = $region5
  $region4: #{lenet_forward.4} parent=0 // pred_region
    _
  $region5: #{lenet_forward.4} parent=0 // pred_fallthru
    _
  // Predicated region
  $region6: #{lenet_forward.4} parent=0 // pred_check
    _
  $region7: #{lenet_forward.4} parent=0 // pred_check_branch
    %14 = sbr.rel (0) target = $region9
  $region8: #{lenet_forward.4} parent=0 // pred_region
    _
  $region9: #{lenet_forward.4} parent=0 // pred_fallthru
    _
  // Predicated region
  $region10: #{lenet_forward.4} parent=0 // pred_check
    _
  $region11: #{lenet_forward.4} parent=0 // pred_check_branch
    %16 = sbr.rel (0) target = $region13
  $region12: #{lenet_forward.4} parent=0 // pred_region
    _
  $region13: #{lenet_forward.4} parent=0 // pred_fallthru
    _
  // Predicated region
  $region14: #{lenet_forward.4} parent=0 // pred_check
    _
  $region15: #{lenet_forward.4} parent=0 // pred_check_branch
    %18 = sbr.rel (0) target = $region17
  $region16: #{lenet_forward.4} parent=0 // pred_region
    _
  $region17: #{lenet_forward.4} parent=0 // pred_fallthru
    _
  // Predicated region
  $region18: #{lenet_forward.4} parent=0 // pred_check
    _
  $region19: #{lenet_forward.4} parent=0 // pred_check_branch
    %20 = sbr.rel (0) target = $region21
  $region20: #{lenet_forward.4} parent=0 // pred_region
    _
  $region21: #{lenet_forward.4} parent=0 // pred_fallthru
    _
  // Predicated region
  $region22: #{lenet_forward.4} parent=0 // pred_check
    _
  $region23: #{lenet_forward.4} parent=0 // pred_check_branch
    %22 = sbr.rel (0) target = $region25
  $region24: #{lenet_forward.4} parent=0 // pred_region
    _
  $region25: #{lenet_forward.4} parent=0 // pred_fallthru
    _
  %v24 = vld [vmem:[%s4] sm:$0xff]
  %v25 = vld [vmem:[%s4 + $0x8] sm:$0xff]
  %v26 = vld [vmem:[%s5] sm:$0xff]
  %v27 = vld [vmem:[%s5 + $0x8] sm:$0xff]
  %v28 = vld [vmem:[%s0] sm:$0xf]
  %v29 = vld [vmem:[%s0 + $0x4] sm:$0xf]
  %v30 = vld [vmem:[%s0 + $0x8] sm:$0xf]
  %v31 = vld [vmem:[%s0 + $0xc] sm:$0xf]
  %v32 = vld [vmem:[%s0 + $0x10] sm:$0xf]
  %v33 = vld [vmem:[%s0 + $0x14] sm:$0xf]
  %v34 = vld [vmem:[%s0 + $0x18] sm:$0xf]
  %v35 = vld [vmem:[%s0 + $0x1c] sm:$0xf]
  %v36 = vld [vmem:[%s0 + $0x20] sm:$0xf]
  %v37 = vld [vmem:[%s0 + $0x24] sm:$0xf]
  %v38 = vld [vmem:[%s0 + $0x28] sm:$0xf]
  %v39 = vld [vmem:[%s0 + $0x2c] sm:$0xf]
  %v40 = vld [vmem:[%s0 + $0x30] sm:$0xf]
  %v41 = vld [vmem:[%s0 + $0x34] sm:$0xf]
  %v42 = vld [vmem:[%s0 + $0x38] sm:$0xf]
  %v43 = vld [vmem:[%s0 + $0x3c] sm:$0xf]
  %v44 = vld [vmem:[%s0 + $0x40] sm:$0xf]
  %v45 = vld [vmem:[%s0 + $0x44] sm:$0xf]
  %v46 = vld [vmem:[%s0 + $0x48] sm:$0x7]
  %48 = vset.pattern.permute.xlu0 0
  %49 = vperm.xlu0 %48, %v26
  %v50 = vpop.permute.xlu0 %49
  %53 = vset.pattern.permute.xlu0 0
  %54 = vperm.xlu0 %53, %v27
  %v55 = vpop.permute.xlu0 %54
  %v59 = vunpack.c.l.b16 %v24
  %v60 = vunpack.c.h.b16 %v24
  %v61 = vunpack.c.l.b16 %v25
  %v62 = vunpack.c.h.b16 %v25
  %v63 = vpack.c.b16 %v61, %v59
  %v64 = vpack.c.b16 %v62, %v60
  %v85 = vunpack.c.l.b16 %v28
  %v86 = vunpack.c.l.b16 %v29
  %v87 = vunpack.c.l.b16 %v30
  %v88 = vunpack.c.l.b16 %v31
  %v89 = vunpack.c.l.b16 %v32
  %v90 = vunpack.c.l.b16 %v33
  %v91 = vunpack.c.l.b16 %v34
  %v92 = vunpack.c.l.b16 %v35
  %v93 = vunpack.c.l.b16 %v36
  %v94 = vunpack.c.l.b16 %v37
  %v95 = vunpack.c.l.b16 %v38
  %v96 = vunpack.c.l.b16 %v39
  %v97 = vunpack.c.l.b16 %v40
  %v98 = vunpack.c.l.b16 %v41
  %v99 = vunpack.c.l.b16 %v42
  %v100 = vunpack.c.l.b16 %v43
  %v101 = vunpack.c.l.b16 %v44
  %v102 = vunpack.c.l.b16 %v45
  %v103 = vunpack.c.l.b16 %v46
  %v104 = vpack.c.b16 %v86, %v85
  %v105 = vpack.c.b16 %v88, %v87
  %v106 = vpack.c.b16 %v90, %v89
  %v107 = vpack.c.b16 %v92, %v91
  %v108 = vpack.c.b16 %v94, %v93
  %v109 = vpack.c.b16 %v96, %v95
  %v110 = vpack.c.b16 %v98, %v97
  %v111 = vpack.c.b16 %v100, %v99
  %v112 = vpack.c.b16 %v102, %v101
  %v113 = vpack.c.b16 %v103, %v103
  %vm123 = vcmask 179200
  %v125 = vsel %vm123, %v64, 0
  %vm127 = vcmask 1042432
  %v129 = vsel %vm127, %v113, 0
  %131 = vmatpush.bf16.msra.mxu0 %v111
  %132 = vmatpush.bf16.msra.mxu0 %v110
  %133 = vmatpush.bf16.msra.mxu0 %v109
  %134 = vmatpush.bf16.msra.mxu0 %v108
  %135 = vmatpush.bf16.msra.mxu0 %v107
  %136 = vmatpush.bf16.msra.mxu0 %v106
  %137 = vmatpush.bf16.msra.mxu0 %v105
  %138 = vmatpush.bf16.msra.mxu0 %v104
  %139 = vmatmul.bf16.gmra.mxu0 %v63
  %v140 = vpop.f32.mrf.mxu0
  %v141 = vadd.f32 %v50, %v140
  %v142 = vpop.f32.mrf.mxu0
  %v143 = vadd.f32 %v55, %v142
  %144 = vdwg.mxu0
  %145 = vmatpush.bf16.msra.mxu0 0
  %146 = vmatpush.bf16.msra.mxu0 0
  %147 = vmatpush.bf16.msra.mxu0 0
  %148 = vmatpush.bf16.msra.mxu0 0
  %149 = vmatpush.bf16.msra.mxu0 0
  %150 = vmatpush.bf16.msra.mxu0 0
  %151 = vmatpush.bf16.msra.mxu0 %v129
  %152 = vmatpush.bf16.msra.mxu0 %v112
  %153 = vmatmul.bf16.gmra.mxu0 %v125
  %v154 = vpop.f32.mrf.mxu0
  %v155 = vadd.f32 %v141, %v154
  %v156 = vpop.f32.mrf.mxu0
  %v157 = vadd.f32 %v143, %v156
  %158 = vdwg.mxu0
  %v159 = vmax.f32 %v155, 0.0
  %v160 = vmax.f32 %v157, 0.0
  %v161 = vld [vmem:[%s1] sm:$0xf]
  %v162 = vld [vmem:[%s1 + $0x4] sm:$0xf]
  %v163 = vld [vmem:[%s1 + $0x8] sm:$0xf]
  %v164 = vld [vmem:[%s1 + $0xc] sm:$0xf]
  %v165 = vld [vmem:[%s1 + $0x10] sm:$0xf]
  %v166 = vld [vmem:[%s1 + $0x14] sm:$0xf]
  %v167 = vld [vmem:[%s1 + $0x18] sm:$0xf]
  %v168 = vld [vmem:[%s1 + $0x1c] sm:$0xf]
  %v169 = vld [vmem:[%s1 + $0x20] sm:$0xf]
  %v170 = vld [vmem:[%s1 + $0x24] sm:$0xf]
  %v171 = vld [vmem:[%s1 + $0x28] sm:$0xf]
  %v172 = vld [vmem:[%s1 + $0x2c] sm:$0xf]
  %v173 = vld [vmem:[%s1 + $0x30] sm:$0xf]
  %v174 = vld [vmem:[%s1 + $0x34] sm:$0xf]
  %v175 = vld [vmem:[%s1 + $0x38] sm:$0xf]
  %v176 = vld [vmem:[%s1 + $0x3c] sm:$0xf]
  %v177 = vld [vmem:[%s1 + $0x40] sm:$0xf]
  %v178 = vld [vmem:[%s1 + $0x44] sm:$0xf]
  %v179 = vld [vmem:[%s1 + $0x48] sm:$0x7]
  %v199 = vunpack.c.l.b16 %v161
  %v200 = vunpack.c.l.b16 %v162
  %v201 = vunpack.c.l.b16 %v163
  %v202 = vunpack.c.l.b16 %v164
  %v203 = vunpack.c.l.b16 %v165
  %v204 = vunpack.c.l.b16 %v166
  %v205 = vunpack.c.l.b16 %v167
  %v206 = vunpack.c.l.b16 %v168
  %v207 = vunpack.c.l.b16 %v169
  %v208 = vunpack.c.l.b16 %v170
  %v209 = vunpack.c.l.b16 %v171
  %v210 = vunpack.c.l.b16 %v172
  %v211 = vunpack.c.l.b16 %v173
  %v212 = vunpack.c.l.b16 %v174
  %v213 = vunpack.c.l.b16 %v175
  %v214 = vunpack.c.l.b16 %v176
  %v215 = vunpack.c.l.b16 %v177
  %v216 = vunpack.c.l.b16 %v178
  %v217 = vunpack.c.l.b16 %v179
  %v218 = vpack.c.b16 %v200, %v199
  %v219 = vpack.c.b16 %v202, %v201
  %v220 = vpack.c.b16 %v204, %v203
  %v221 = vpack.c.b16 %v206, %v205
  %v222 = vpack.c.b16 %v208, %v207
  %v223 = vpack.c.b16 %v210, %v209
  %v224 = vpack.c.b16 %v212, %v211
  %v225 = vpack.c.b16 %v214, %v213
  %v226 = vpack.c.b16 %v216, %v215
  %v227 = vpack.c.b16 %v217, %v217
  %v238 = vsel %vm127, %v227, 0
  %240 = vmatpush.bf16.msra.mxu0 %v225
  %241 = vmatpush.bf16.msra.mxu0 %v224
  %242 = vmatpush.bf16.msra.mxu0 %v223
  %243 = vmatpush.bf16.msra.mxu0 %v222
  %244 = vmatpush.bf16.msra.mxu0 %v221
  %245 = vmatpush.bf16.msra.mxu0 %v220
  %246 = vmatpush.bf16.msra.mxu0 %v219
  %247 = vmatpush.bf16.msra.mxu0 %v218
  %248 = vmatmul.bf16.gmra.mxu0 %v63
  %v249 = vpop.f32.mrf.mxu0
  %v250 = vadd.f32 %v50, %v249
  %v251 = vpop.f32.mrf.mxu0
  %v252 = vadd.f32 %v55, %v251
  %253 = vdwg.mxu0
  %254 = vmatpush.bf16.msra.mxu0 0
  %255 = vmatpush.bf16.msra.mxu0 0
  %256 = vmatpush.bf16.msra.mxu0 0
  %257 = vmatpush.bf16.msra.mxu0 0
  %258 = vmatpush.bf16.msra.mxu0 0
  %259 = vmatpush.bf16.msra.mxu0 0
  %260 = vmatpush.bf16.msra.mxu0 %v238
  %261 = vmatpush.bf16.msra.mxu0 %v226
  %262 = vmatmul.bf16.gmra.mxu0 %v125
  %v263 = vpop.f32.mrf.mxu0
  %v264 = vadd.f32 %v250, %v263
  %v265 = vpop.f32.mrf.mxu0
  %v266 = vadd.f32 %v252, %v265
  %267 = vdwg.mxu0
  %v268 = vmax.f32 %v264, 0.0
  %v269 = vmax.f32 %v266, 0.0
  %v270 = vadd.f32 %v159, %v268
  %v271 = vadd.f32 %v160, %v269
  %v272 = vld [vmem:[%s2] sm:$0xf]
  %v273 = vld [vmem:[%s2 + $0x4] sm:$0xf]
  %v274 = vld [vmem:[%s2 + $0x8] sm:$0xf]
  %v275 = vld [vmem:[%s2 + $0xc] sm:$0xf]
  %v276 = vld [vmem:[%s2 + $0x10] sm:$0xf]
  %v277 = vld [vmem:[%s2 + $0x14] sm:$0xf]
  %v278 = vld [vmem:[%s2 + $0x18] sm:$0xf]
  %v279 = vld [vmem:[%s2 + $0x1c] sm:$0xf]
  %v280 = vld [vmem:[%s2 + $0x20] sm:$0xf]
  %v281 = vld [vmem:[%s2 + $0x24] sm:$0xf]
  %v282 = vld [vmem:[%s2 + $0x28] sm:$0xf]
  %v283 = vld [vmem:[%s2 + $0x2c] sm:$0xf]
  %v284 = vld [vmem:[%s2 + $0x30] sm:$0xf]
  %v285 = vld [vmem:[%s2 + $0x34] sm:$0xf]
  %v286 = vld [vmem:[%s2 + $0x38] sm:$0xf]
  %v287 = vld [vmem:[%s2 + $0x3c] sm:$0xf]
  %v288 = vld [vmem:[%s2 + $0x40] sm:$0xf]
  %v289 = vld [vmem:[%s2 + $0x44] sm:$0xf]
  %v290 = vld [vmem:[%s2 + $0x48] sm:$0x7]
  %v310 = vunpack.c.l.b16 %v272
  %v311 = vunpack.c.l.b16 %v273
  %v312 = vunpack.c.l.b16 %v274
  %v313 = vunpack.c.l.b16 %v275
  %v314 = vunpack.c.l.b16 %v276
  %v315 = vunpack.c.l.b16 %v277
  %v316 = vunpack.c.l.b16 %v278
  %v317 = vunpack.c.l.b16 %v279
  %v318 = vunpack.c.l.b16 %v280
  %v319 = vunpack.c.l.b16 %v281
  %v320 = vunpack.c.l.b16 %v282
  %v321 = vunpack.c.l.b16 %v283
  %v322 = vunpack.c.l.b16 %v284
  %v323 = vunpack.c.l.b16 %v285
  %v324 = vunpack.c.l.b16 %v286
  %v325 = vunpack.c.l.b16 %v287
  %v326 = vunpack.c.l.b16 %v288
  %v327 = vunpack.c.l.b16 %v289
  %v328 = vunpack.c.l.b16 %v290
  %v329 = vpack.c.b16 %v311, %v310
  %v330 = vpack.c.b16 %v313, %v312
  %v331 = vpack.c.b16 %v315, %v314
  %v332 = vpack.c.b16 %v317, %v316
  %v333 = vpack.c.b16 %v319, %v318
  %v334 = vpack.c.b16 %v321, %v320
  %v335 = vpack.c.b16 %v323, %v322
  %v336 = vpack.c.b16 %v325, %v324
  %v337 = vpack.c.b16 %v327, %v326
  %v338 = vpack.c.b16 %v328, %v328
  %v349 = vsel %vm127, %v338, 0
  %351 = vmatpush.bf16.msra.mxu0 %v336
  %352 = vmatpush.bf16.msra.mxu0 %v335
  %353 = vmatpush.bf16.msra.mxu0 %v334
  %354 = vmatpush.bf16.msra.mxu0 %v333
  %355 = vmatpush.bf16.msra.mxu0 %v332
  %356 = vmatpush.bf16.msra.mxu0 %v331
  %357 = vmatpush.bf16.msra.mxu0 %v330
  %358 = vmatpush.bf16.msra.mxu0 %v329
  %359 = vmatmul.bf16.gmra.mxu0 %v63
  %v360 = vpop.f32.mrf.mxu0
  %v361 = vadd.f32 %v50, %v360
  %v362 = vpop.f32.mrf.mxu0
  %v363 = vadd.f32 %v55, %v362
  %364 = vdwg.mxu0
  %365 = vmatpush.bf16.msra.mxu0 0
  %366 = vmatpush.bf16.msra.mxu0 0
  %367 = vmatpush.bf16.msra.mxu0 0
  %368 = vmatpush.bf16.msra.mxu0 0
  %369 = vmatpush.bf16.msra.mxu0 0
  %370 = vmatpush.bf16.msra.mxu0 0
  %371 = vmatpush.bf16.msra.mxu0 %v349
  %372 = vmatpush.bf16.msra.mxu0 %v337
  %373 = vmatmul.bf16.gmra.mxu0 %v125
  %v374 = vpop.f32.mrf.mxu0
  %v375 = vadd.f32 %v361, %v374
  %v376 = vpop.f32.mrf.mxu0
  %v377 = vadd.f32 %v363, %v376
  %378 = vdwg.mxu0
  %v379 = vmax.f32 %v375, 0.0
  %v380 = vmax.f32 %v377, 0.0
  %v381 = vadd.f32 %v270, %v379
  %v382 = vadd.f32 %v271, %v380
  %v383 = vld [vmem:[%s3] sm:$0xf]
  %v384 = vld [vmem:[%s3 + $0x4] sm:$0xf]
  %v385 = vld [vmem:[%s3 + $0x8] sm:$0xf]
  %v386 = vld [vmem:[%s3 + $0xc] sm:$0xf]
  %v387 = vld [vmem:[%s3 + $0x10] sm:$0xf]
  %v388 = vld [vmem:[%s3 + $0x14] sm:$0xf]
  %v389 = vld [vmem:[%s3 + $0x18] sm:$0xf]
  %v390 = vld [vmem:[%s3 + $0x1c] sm:$0xf]
  %v391 = vld [vmem:[%s3 + $0x20] sm:$0xf]
  %v392 = vld [vmem:[%s3 + $0x24] sm:$0xf]
  %v393 = vld [vmem:[%s3 + $0x28] sm:$0xf]
  %v394 = vld [vmem:[%s3 + $0x2c] sm:$0xf]
  %v395 = vld [vmem:[%s3 + $0x30] sm:$0xf]
  %v396 = vld [vmem:[%s3 + $0x34] sm:$0xf]
  %v397 = vld [vmem:[%s3 + $0x38] sm:$0xf]
  %v398 = vld [vmem:[%s3 + $0x3c] sm:$0xf]
  %v399 = vld [vmem:[%s3 + $0x40] sm:$0xf]
  %v400 = vld [vmem:[%s3 + $0x44] sm:$0xf]
  %v401 = vld [vmem:[%s3 + $0x48] sm:$0x7]
  %v421 = vunpack.c.l.b16 %v383
  %v422 = vunpack.c.l.b16 %v384
  %v423 = vunpack.c.l.b16 %v385
  %v424 = vunpack.c.l.b16 %v386
  %v425 = vunpack.c.l.b16 %v387
  %v426 = vunpack.c.l.b16 %v388
  %v427 = vunpack.c.l.b16 %v389
  %v428 = vunpack.c.l.b16 %v390
  %v429 = vunpack.c.l.b16 %v391
  %v430 = vunpack.c.l.b16 %v392
  %v431 = vunpack.c.l.b16 %v393
  %v432 = vunpack.c.l.b16 %v394
  %v433 = vunpack.c.l.b16 %v395
  %v434 = vunpack.c.l.b16 %v396
  %v435 = vunpack.c.l.b16 %v397
  %v436 = vunpack.c.l.b16 %v398
  %v437 = vunpack.c.l.b16 %v399
  %v438 = vunpack.c.l.b16 %v400
  %v439 = vunpack.c.l.b16 %v401
  %v440 = vpack.c.b16 %v422, %v421
  %v441 = vpack.c.b16 %v424, %v423
  %v442 = vpack.c.b16 %v426, %v425
  %v443 = vpack.c.b16 %v428, %v427
  %v444 = vpack.c.b16 %v430, %v429
  %v445 = vpack.c.b16 %v432, %v431
  %v446 = vpack.c.b16 %v434, %v433
  %v447 = vpack.c.b16 %v436, %v435
  %v448 = vpack.c.b16 %v438, %v437
  %v449 = vpack.c.b16 %v439, %v439
  %v460 = vsel %vm127, %v449, 0
  %462 = vmatpush.bf16.msra.mxu0 %v447
  %463 = vmatpush.bf16.msra.mxu0 %v446
  %464 = vmatpush.bf16.msra.mxu0 %v445
  %465 = vmatpush.bf16.msra.mxu0 %v444
  %466 = vmatpush.bf16.msra.mxu0 %v443
  %467 = vmatpush.bf16.msra.mxu0 %v442
  %468 = vmatpush.bf16.msra.mxu0 %v441
  %469 = vmatpush.bf16.msra.mxu0 %v440
  %470 = vmatmul.bf16.gmra.mxu0 %v63
  %v471 = vpop.f32.mrf.mxu0
  %v472 = vadd.f32 %v50, %v471
  %v473 = vpop.f32.mrf.mxu0
  %v474 = vadd.f32 %v55, %v473
  %475 = vdwg.mxu0
  %476 = vmatpush.bf16.msra.mxu0 0
  %477 = vmatpush.bf16.msra.mxu0 0
  %478 = vmatpush.bf16.msra.mxu0 0
  %479 = vmatpush.bf16.msra.mxu0 0
  %480 = vmatpush.bf16.msra.mxu0 0
  %481 = vmatpush.bf16.msra.mxu0 0
  %482 = vmatpush.bf16.msra.mxu0 %v460
  %483 = vmatpush.bf16.msra.mxu0 %v448
  %484 = vmatmul.bf16.gmra.mxu0 %v125
  %v485 = vpop.f32.mrf.mxu0
  %v486 = vadd.f32 %v472, %v485
  %v487 = vpop.f32.mrf.mxu0
  %v488 = vadd.f32 %v474, %v487
  %489 = vdwg.mxu0
  %v490 = vmax.f32 %v486, 0.0
  %v491 = vmax.f32 %v488, 0.0
  %v492 = vadd.f32 %v381, %v490
  %v493 = vadd.f32 %v382, %v491
  %v494 = vmul.f32 %v492, 0.25
  %v495 = vmul.f32 %v493, 0.25
  %v496 = vpack.c.bf16 %v494, %v494
  %v497 = vpack.c.bf16 %v495, %v495
  %vm498 = vcmask 404480
  %499 = vst.msk [vmem:[%s6] sm:$0xf] %vm498, %v496
  %500 = vst.msk [vmem:[%s6 + $0x4] sm:$0xf] %vm498, %v497
  // Predicated region
  $region26: #{lenet_forward.4} parent=0 // pred_check
    _
  $region27: #{lenet_forward.4} parent=0 // pred_check_branch
    %502 = sbr.rel (0) target = $region29
  $region28: #{lenet_forward.4} parent=0 // pred_region
    _
  $region29: #{lenet_forward.4} parent=0 // pred_fallthru
    _
  // Predicated region
  $region30: #{lenet_forward.4} parent=0 // pred_check
    _
  $region31: #{lenet_forward.4} parent=0 // pred_check_branch
    %504 = sbr.rel (0) target = $region33
  $region32: #{lenet_forward.4} parent=0 // pred_region
    _
  $region33: #{lenet_forward.4} parent=0 // pred_fallthru
    _

// kernel: lenet_forward.5
$region0: #{lenet_forward.5}
  #allocation0 [shape = 'u32[]', space=smem, size = 0x4, offset = 0x4, fixed_abs, tag = 'smem constant byte address 0x4 - core index']
  #allocation1 [shape = 'u32[72,128]{1,0:T(1,128)}', space=vmem, size = 0x9000, scoped, tag = 'internal scratch']
  %s0 = inlined_call_operand.vmem [shape: bf16[2,400], index: 0, kind: input, shape index: {}]
  %s1 = inlined_call_operand.vmem [shape: bf16[400,120], index: 1, kind: input, shape index: {}]
  %s2 = inlined_call_operand.vmem [shape: f32[1,120], index: 2, kind: input, shape index: {}]
  %s3 = inlined_call_operand.vmem [shape: bf16[120,84], index: 3, kind: input, shape index: {}]
  %s4 = inlined_call_operand.vmem [shape: f32[1,84], index: 4, kind: input, shape index: {}]
  %s5 = inlined_call_operand.vmem [shape: bf16[84,10], index: 5, kind: input, shape index: {}]
  %s6 = inlined_call_operand.vmem [shape: f32[1,10], index: 6, kind: input, shape index: {}]
  %s7 = inlined_call_operand.hbm [shape: f32[2,10], index: 7, kind: output, shape index: {}]
  %s8 = sld [smem:[#allocation0]]
  $region38: #{lenet_forward.5} parent=0
    _
  %s10 = ssub.s32 1, %s8
  %s11 = scalar_select 0, %s10, %s8
  $region1: #{lenet_forward.5} parent=0
    #allocation2 [shape = 'u8[1024]{0}', space=vmem, size = 0x400, scoped, tag = 'output window, operand 0, single buffered']
    #allocation3 [shape = 's32[1]{0}', space=sflag, size = 0x4, scoped, tag = 'scoped memory for lenet_forward.5']
    %12 = vsyncpa [#allocation3], 0
    // Predicated region
    $region2: #{lenet_forward.5} parent=1 // pred_check
      _
    $region3: #{lenet_forward.5} parent=1 // pred_check_branch
      %14 = sbr.rel (0) target = $region5
    $region4: #{lenet_forward.5} parent=1 // pred_region
      _
    $region5: #{lenet_forward.5} parent=1 // pred_fallthru
      _
    // Predicated region
    $region6: #{lenet_forward.5} parent=1 // pred_check
      _
    $region7: #{lenet_forward.5} parent=1 // pred_check_branch
      %16 = sbr.rel (0) target = $region9
    $region8: #{lenet_forward.5} parent=1 // pred_region
      _
    $region9: #{lenet_forward.5} parent=1 // pred_fallthru
      _
    // Predicated region
    $region10: #{lenet_forward.5} parent=1 // pred_check
      _
    $region11: #{lenet_forward.5} parent=1 // pred_check_branch
      %18 = sbr.rel (0) target = $region13
    $region12: #{lenet_forward.5} parent=1 // pred_region
      _
    $region13: #{lenet_forward.5} parent=1 // pred_fallthru
      _
    // Predicated region
    $region14: #{lenet_forward.5} parent=1 // pred_check
      _
    $region15: #{lenet_forward.5} parent=1 // pred_check_branch
      %20 = sbr.rel (0) target = $region17
    $region16: #{lenet_forward.5} parent=1 // pred_region
      _
    $region17: #{lenet_forward.5} parent=1 // pred_fallthru
      _
    // Predicated region
    $region18: #{lenet_forward.5} parent=1 // pred_check
      _
    $region19: #{lenet_forward.5} parent=1 // pred_check_branch
      %22 = sbr.rel (0) target = $region21
    $region20: #{lenet_forward.5} parent=1 // pred_region
      _
    $region21: #{lenet_forward.5} parent=1 // pred_fallthru
      _
    // Predicated region
    $region22: #{lenet_forward.5} parent=1 // pred_check
      _
    $region23: #{lenet_forward.5} parent=1 // pred_check_branch
      %24 = sbr.rel (0) target = $region25
    $region24: #{lenet_forward.5} parent=1 // pred_region
      _
    $region25: #{lenet_forward.5} parent=1 // pred_fallthru
      _
    // Predicated region
    $region26: #{lenet_forward.5} parent=1 // pred_check
      _
    $region27: #{lenet_forward.5} parent=1 // pred_check_branch
      %26 = sbr.rel (0) target = $region29
    $region28: #{lenet_forward.5} parent=1 // pred_region
      _
    $region29: #{lenet_forward.5} parent=1 // pred_fallthru
      _
    %v28 = vld [vmem:[%s0] sm:$0xf]
    %v29 = vld [vmem:[%s1] sm:$0xf]
    %v30 = vld [vmem:[%s1 + $0x4] sm:$0xf]
    %v31 = vld [vmem:[%s1 + $0x8] sm:$0xf]
    %v32 = vld [vmem:[%s1 + $0xc] sm:$0xf]
    %v33 = vld [vmem:[%s1 + $0x10] sm:$0xf]
    %v34 = vld [vmem:[%s1 + $0x14] sm:$0xf]
    %v35 = vld [vmem:[%s1 + $0x18] sm:$0xf]
    %v36 = vld [vmem:[%s1 + $0x1c] sm:$0xf]
    %v37 = vld [vmem:[%s1 + $0x20] sm:$0xf]
    %v38 = vld [vmem:[%s1 + $0x24] sm:$0xf]
    %v39 = vld [vmem:[%s1 + $0x28] sm:$0xf]
    %v40 = vld [vmem:[%s1 + $0x2c] sm:$0xf]
    %v41 = vld [vmem:[%s1 + $0x30] sm:$0xf]
    %v42 = vld [vmem:[%s1 + $0x34] sm:$0xf]
    %v43 = vld [vmem:[%s1 + $0x38] sm:$0xf]
    %v44 = vld [vmem:[%s1 + $0x3c] sm:$0xf]
    %v45 = vld [vmem:[%s1 + $0x40] sm:$0xf]
    %v46 = vld [vmem:[%s1 + $0x44] sm:$0xf]
    %v47 = vld [vmem:[%s1 + $0x48] sm:$0xf]
    %v48 = vld [vmem:[%s1 + $0x4c] sm:$0xf]
    %v49 = vld [vmem:[%s1 + $0x50] sm:$0xf]
    %v50 = vld [vmem:[%s1 + $0x54] sm:$0xf]
    %v51 = vld [vmem:[%s1 + $0x58] sm:$0xf]
    %v52 = vld [vmem:[%s1 + $0x5c] sm:$0xf]
    %v53 = vld [vmem:[%s1 + $0x60] sm:$0xf]
    %v54 = vld [vmem:[%s1 + $0x64] sm:$0xf]
    %v55 = vld [vmem:[%s1 + $0x68] sm:$0xf]
    %v56 = vld [vmem:[%s1 + $0x6c] sm:$0xf]
    %v57 = vld [vmem:[%s1 + $0x70] sm:$0xf]
    %v58 = vld [vmem:[%s1 + $0x74] sm:$0xf]
    %v59 = vld [vmem:[%s1 + $0x78] sm:$0xf]
    %v60 = vld [vmem:[%s1 + $0x7c] sm:$0xf]
    %v61 = vld [vmem:[%s1 + $0x80] sm:$0xf]
    %v62 = vld [vmem:[%s1 + $0x84] sm:$0xf]
    %v63 = vld [vmem:[%s1 + $0x88] sm:$0xf]
    %v64 = vld [vmem:[%s1 + $0x8c] sm:$0xf]
    %v65 = vld [vmem:[%s1 + $0x90] sm:$0xf]
    %v66 = vld [vmem:[%s1 + $0x94] sm:$0xf]
    %v67 = vld [vmem:[%s1 + $0x98] sm:$0xf]
    %v68 = vld [vmem:[%s1 + $0x9c] sm:$0xf]
    %v69 = vld [vmem:[%s1 + $0xa0] sm:$0xf]
    %v70 = vld [vmem:[%s1 + $0xa4] sm:$0xf]
    %v71 = vld [vmem:[%s1 + $0xa8] sm:$0xf]
    %v72 = vld [vmem:[%s1 + $0xac] sm:$0xf]
    %v73 = vld [vmem:[%s1 + $0xb0] sm:$0xf]
    %v74 = vld [vmem:[%s1 + $0xb4] sm:$0xf]
    %v75 = vld [vmem:[%s1 + $0xb8] sm:$0xf]
    %v76 = vld [vmem:[%s1 + $0xbc] sm:$0xf]
    %v77 = vld [vmem:[%s1 + $0xc0] sm:$0xf]
    %v78 = vld [vmem:[%s1 + $0xc4] sm:$0xf]
    %v79 = vld [vmem:[%s2] sm:$0x1]
    %v81 = vperm.slane %v79, 0
    %84 = vst [vmem:[#allocation1] ss:$9 sm:$0xff] %v28
    %v85 = vld [vmem:[#allocation1] sm:$0xff]
    %v86 = vld [vmem:[#allocation1 + $0x9] sm:$0xff]
    %v87 = vld [vmem:[#allocation1 + $0x12] sm:$0xff]
    %v88 = vld [vmem:[#allocation1 + $0x1b] sm:$0xff]
    %v142 = vunpack.c.l.b16 %v29
    %v143 = vunpack.c.l.b16 %v30
    %v144 = vunpack.c.l.b16 %v31
    %v145 = vunpack.c.l.b16 %v32
    %v146 = vunpack.c.l.b16 %v33
    %v147 = vunpack.c.l.b16 %v34
    %v148 = vunpack.c.l.b16 %v35
    %v149 = vunpack.c.l.b16 %v36
    %v150 = vunpack.c.l.b16 %v37
    %v151 = vunpack.c.l.b16 %v38
    %v152 = vunpack.c.l.b16 %v39
    %v153 = vunpack.c.l.b16 %v40
    %v154 = vunpack.c.l.b16 %v41
    %v155 = vunpack.c.l.b16 %v42
    %v156 = vunpack.c.l.b16 %v43
    %v157 = vunpack.c.l.b16 %v44
    %v158 = vunpack.c.l.b16 %v45
    %v159 = vunpack.c.l.b16 %v46
    %v160 = vunpack.c.l.b16 %v47
    %v161 = vunpack.c.l.b16 %v48
    %v162 = vunpack.c.l.b16 %v49
    %v163 = vunpack.c.l.b16 %v50
    %v164 = vunpack.c.l.b16 %v51
    %v165 = vunpack.c.l.b16 %v52
    %v166 = vunpack.c.l.b16 %v53
    %v167 = vunpack.c.l.b16 %v54
    %v168 = vunpack.c.l.b16 %v55
    %v169 = vunpack.c.l.b16 %v56
    %v170 = vunpack.c.l.b16 %v57
    %v171 = vunpack.c.l.b16 %v58
    %v172 = vunpack.c.l.b16 %v59
    %v173 = vunpack.c.l.b16 %v60
    %v174 = vunpack.c.l.b16 %v61
    %v175 = vunpack.c.l.b16 %v62
    %v176 = vunpack.c.l.b16 %v63
    %v177 = vunpack.c.l.b16 %v64
    %v178 = vunpack.c.l.b16 %v65
    %v179 = vunpack.c.l.b16 %v66
    %v180 = vunpack.c.l.b16 %v67
    %v181 = vunpack.c.l.b16 %v68
    %v182 = vunpack.c.l.b16 %v69
    %v183 = vunpack.c.l.b16 %v70
    %v184 = vunpack.c.l.b16 %v71
    %v185 = vunpack.c.l.b16 %v72
    %v186 = vunpack.c.l.b16 %v73
    %v187 = vunpack.c.l.b16 %v74
    %v188 = vunpack.c.l.b16 %v75
    %v189 = vunpack.c.l.b16 %v76
    %v190 = vunpack.c.l.b16 %v77
    %v191 = vunpack.c.l.b16 %v78
    %v192 = vpack.c.b16 %v143, %v142
    %v193 = vpack.c.b16 %v145, %v144
    %v194 = vpack.c.b16 %v147, %v146
    %v195 = vpack.c.b16 %v149, %v148
    %v196 = vpack.c.b16 %v151, %v150
    %v197 = vpack.c.b16 %v153, %v152
    %v198 = vpack.c.b16 %v155, %v154
    %v199 = vpack.c.b16 %v157, %v156
    %v200 = vpack.c.b16 %v159, %v158
    %v201 = vpack.c.b16 %v161, %v160
    %v202 = vpack.c.b16 %v163, %v162
    %v203 = vpack.c.b16 %v165, %v164
    %v204 = vpack.c.b16 %v167, %v166
    %v205 = vpack.c.b16 %v169, %v168
    %v206 = vpack.c.b16 %v171, %v170
    %v207 = vpack.c.b16 %v173, %v172
    %v208 = vpack.c.b16 %v175, %v174
    %v209 = vpack.c.b16 %v177, %v176
    %v210 = vpack.c.b16 %v179, %v178
    %v211 = vpack.c.b16 %v181, %v180
    %v212 = vpack.c.b16 %v183, %v182
    %v213 = vpack.c.b16 %v185, %v184
    %v214 = vpack.c.b16 %v187, %v186
    %v215 = vpack.c.b16 %v189, %v188
    %v216 = vpack.c.b16 %v191, %v190
    %vm242 = vcmask 130048
    %v243 = vsel %vm242, %v88, 0
    %245 = vmatpush.bf16.msra.mxu0 %v199
    %246 = vmatpush.bf16.msra.mxu0 %v198
    %247 = vmatpush.bf16.msra.mxu0 %v197
    %248 = vmatpush.bf16.msra.mxu0 %v196
    %249 = vmatpush.bf16.msra.mxu0 %v195
    %250 = vmatpush.bf16.msra.mxu0 %v194
    %251 = vmatpush.bf16.msra.mxu0 %v193
    %252 = vmatpush.bf16.msra.mxu0 %v192
    %253 = vmatmul.bf16.gmra.mxu0 %v85
    %v254 = vpop.f32.mrf.mxu0
    %v255 = vadd.f32 %v81, %v254
    %v256 = vpop.f32.mrf.mxu0
    %257 = vdwg.mxu0
    %258 = vmatpush.bf16.msra.mxu0 %v207
    %259 = vmatpush.bf16.msra.mxu0 %v206
    %260 = vmatpush.bf16.msra.mxu0 %v205
    %261 = vmatpush.bf16.msra.mxu0 %v204
    %262 = vmatpush.bf16.msra.mxu0 %v203
    %263 = vmatpush.bf16.msra.mxu0 %v202
    %264 = vmatpush.bf16.msra.mxu0 %v201
    %265 = vmatpush.bf16.msra.mxu0 %v200
    %266 = vmatmul.bf16.gmra.mxu0 %v86
    %v267 = vpop.f32.mrf.mxu0
    %v268 = vadd.f32 %v255, %v267
    %v269 = vpop.f32.mrf.mxu0
    %270 = vdwg.mxu0
    %271 = vmatpush.bf16.msra.mxu0 %v215
    %272 = vmatpush.bf16.msra.mxu0 %v214
    %273 = vmatpush.bf16.msra.mxu0 %v213
    %274 = vmatpush.bf16.msra.mxu0 %v212
    %275 = vmatpush.bf16.msra.mxu0 %v211
    %276 = vmatpush.bf16.msra.mxu0 %v210
    %277 = vmatpush.bf16.msra.mxu0 %v209
    %278 = vmatpush.bf16.msra.mxu0 %v208
    %279 = vmatmul.bf16.gmra.mxu0 %v87
    %v280 = vpop.f32.mrf.mxu0
    %v281 = vadd.f32 %v268, %v280
    %v282 = vpop.f32.mrf.mxu0
    %283 = vdwg.mxu0
    %284 = vmatpush.bf16.msra.mxu0 0
    %285 = vmatpush.bf16.msra.mxu0 0
    %286 = vmatpush.bf16.msra.mxu0 0
    %287 = vmatpush.bf16.msra.mxu0 0
    %288 = vmatpush.bf16.msra.mxu0 0
    %289 = vmatpush.bf16.msra.mxu0 0
    %290 = vmatpush.bf16.msra.mxu0 0
    %291 = vmatpush.bf16.msra.mxu0 %v216
    %292 = vmatmul.bf16.gmra.mxu0 %v243
    %v293 = vpop.f32.mrf.mxu0
    %v294 = vadd.f32 %v281, %v293
    %v295 = vpop.f32.mrf.mxu0
    %296 = vdwg.mxu0
    %v297 = vmax.f32 %v294, 0.0
    %v298 = vpack.c.bf16 %v297, %v297
    %v299 = vld [vmem:[%s3] sm:$0xf]
    %v300 = vld [vmem:[%s3 + $0x4] sm:$0xf]
    %v301 = vld [vmem:[%s3 + $0x8] sm:$0xf]
    %v302 = vld [vmem:[%s3 + $0xc] sm:$0xf]
    %v303 = vld [vmem:[%s3 + $0x10] sm:$0xf]
    %v304 = vld [vmem:[%s3 + $0x14] sm:$0xf]
    %v305 = vld [vmem:[%s3 + $0x18] sm:$0xf]
    %v306 = vld [vmem:[%s3 + $0x1c] sm:$0xf]
    %v307 = vld [vmem:[%s3 + $0x20] sm:$0xf]
    %v308 = vld [vmem:[%s3 + $0x24] sm:$0xf]
    %v309 = vld [vmem:[%s3 + $0x28] sm:$0xf]
    %v310 = vld [vmem:[%s3 + $0x2c] sm:$0xf]
    %v311 = vld [vmem:[%s3 + $0x30] sm:$0xf]
    %v312 = vld [vmem:[%s3 + $0x34] sm:$0xf]
    %v313 = vld [vmem:[%s3 + $0x38] sm:$0xf]
    %v314 = vld [vmem:[%s4] sm:$0x1]
    %v316 = vperm.slane %v314, 0
    %v333 = vunpack.c.l.b16 %v299
    %v334 = vunpack.c.l.b16 %v300
    %v335 = vunpack.c.l.b16 %v301
    %v336 = vunpack.c.l.b16 %v302
    %v337 = vunpack.c.l.b16 %v303
    %v338 = vunpack.c.l.b16 %v304
    %v339 = vunpack.c.l.b16 %v305
    %v340 = vunpack.c.l.b16 %v306
    %v341 = vunpack.c.l.b16 %v307
    %v342 = vunpack.c.l.b16 %v308
    %v343 = vunpack.c.l.b16 %v309
    %v344 = vunpack.c.l.b16 %v310
    %v345 = vunpack.c.l.b16 %v311
    %v346 = vunpack.c.l.b16 %v312
    %v347 = vunpack.c.l.b16 %v313
    %v348 = vpack.c.b16 %v334, %v333
    %v349 = vpack.c.b16 %v336, %v335
    %v350 = vpack.c.b16 %v338, %v337
    %v351 = vpack.c.b16 %v340, %v339
    %v352 = vpack.c.b16 %v342, %v341
    %v353 = vpack.c.b16 %v344, %v343
    %v354 = vpack.c.b16 %v346, %v345
    %v355 = vpack.c.b16 %v347, %v347
    %vm363 = vcmask 982016
    %v365 = vsel %vm363, %v298, 0
    %vm367 = vcmask 1043456
    %v369 = vsel %vm367, %v355, 0
    %371 = vmatpush.bf16.msra.mxu0 %v369
    %372 = vmatpush.bf16.msra.mxu0 %v354
    %373 = vmatpush.bf16.msra.mxu0 %v353
    %374 = vmatpush.bf16.msra.mxu0 %v352
    %375 = vmatpush.bf16.msra.mxu0 %v351
    %376 = vmatpush.bf16.msra.mxu0 %v350
    %377 = vmatpush.bf16.msra.mxu0 %v349
    %378 = vmatpush.bf16.msra.mxu0 %v348
    %379 = vmatmul.bf16.gmra.mxu0 %v365
    %v380 = vpop.f32.mrf.mxu0
    %v381 = vadd.f32 %v316, %v380
    %v382 = vpop.f32.mrf.mxu0
    %383 = vdwg.mxu0
    %v384 = vmax.f32 %v381, 0.0
    %v385 = vpack.c.bf16 %v384, %v384
    %v386 = vld [vmem:[%s5] sm:$0xf]
    %v387 = vld [vmem:[%s5 + $0x4] sm:$0xf]
    %v388 = vld [vmem:[%s5 + $0x8] sm:$0xf]
    %v389 = vld [vmem:[%s5 + $0xc] sm:$0xf]
    %v390 = vld [vmem:[%s5 + $0x10] sm:$0xf]
    %v391 = vld [vmem:[%s5 + $0x14] sm:$0xf]
    %v392 = vld [vmem:[%s5 + $0x18] sm:$0xf]
    %v393 = vld [vmem:[%s5 + $0x1c] sm:$0xf]
    %v394 = vld [vmem:[%s5 + $0x20] sm:$0xf]
    %v395 = vld [vmem:[%s5 + $0x24] sm:$0xf]
    %v396 = vld [vmem:[%s5 + $0x28] sm:$0x3]
    %v397 = vld [vmem:[%s6] sm:$0x1]
    %v399 = vperm.slane %v397, 0
    %v412 = vunpack.c.l.b16 %v386
    %v413 = vunpack.c.l.b16 %v387
    %v414 = vunpack.c.l.b16 %v388
    %v415 = vunpack.c.l.b16 %v389
    %v416 = vunpack.c.l.b16 %v390
    %v417 = vunpack.c.l.b16 %v391
    %v418 = vunpack.c.l.b16 %v392
    %v419 = vunpack.c.l.b16 %v393
    %v420 = vunpack.c.l.b16 %v394
    %v421 = vunpack.c.l.b16 %v395
    %v422 = vunpack.c.l.b16 %v396
    %v423 = vpack.c.b16 %v413, %v412
    %v424 = vpack.c.b16 %v415, %v414
    %v425 = vpack.c.b16 %v417, %v416
    %v426 = vpack.c.b16 %v419, %v418
    %v427 = vpack.c.b16 %v421, %v420
    %v428 = vpack.c.b16 %v422, %v422
    %vm434 = vcmask 687104
    %v436 = vsel %vm434, %v385, 0
    %vm438 = vcmask 1041408
    %v440 = vsel %vm438, %v428, 0
    %442 = vmatpush.bf16.msra.mxu0 0
    %443 = vmatpush.bf16.msra.mxu0 0
    %444 = vmatpush.bf16.msra.mxu0 %v440
    %445 = vmatpush.bf16.msra.mxu0 %v427
    %446 = vmatpush.bf16.msra.mxu0 %v426
    %447 = vmatpush.bf16.msra.mxu0 %v425
    %448 = vmatpush.bf16.msra.mxu0 %v424
    %449 = vmatpush.bf16.msra.mxu0 %v423
    %450 = vmatmul.bf16.gmra.mxu0 %v436
    %v451 = vpop.f32.mrf.mxu0
    %v452 = vadd.f32 %v399, %v451
    %v453 = vpop.f32.mrf.mxu0
    %454 = vdwg.mxu0
    %v455 = vmax.f32 %v452, 0.0
    %vm456 = vcmask 74752
    %v457 = vsel %vm456, %v455, -inf
    %458 = vmax.xlane.f32.xlu0 %v457
    %v459 = vpop.xlane.xlu0 %458
    %v460 = vsub.f32 %v455, %v459
    %v461 = vmul.f32 %v460, 1.442695
    %v462 = vpow.pop %v461
    %v463 = vsel %vm456, %v462, 0.0
    %464 = vadd.xlane.f32.xlu0 %v463
    %v465 = vpop.xlane.xlu0 %464
    %v466 = vrcp.pop %v465
    %v467 = vmul.f32 %v462, %v466
    %468 = vst.msk [vmem:[#allocation2] sm:$0x3] %vm456, %v467
    // Predicated region
    $region30: #{lenet_forward.5} parent=1 // pred_check
      _
    $region31: #{lenet_forward.5} parent=1 // pred_check_branch
      %470 = sbr.rel (0) target = $region33
    $region32: #{lenet_forward.5} parent=1 // pred_region
      %472 = vsyncadd [#allocation3], 0
      %s474 = sshll.u32 [#allocation2], 4
      %s475 = int_to_ptr.vmem [resolvable:$true] %s474
      %s476 = sshll.u32 %s7, 4
      %s477 = int_to_ptr.hbm [resolvable:$true] %s476
      %479 = dma.vmem_to_hbm [thread:$0]  %s475, 32, %s477, [#allocation3]
    $region33: #{lenet_forward.5} parent=1 // pred_fallthru
      _
    // Predicated region
    $region34: #{lenet_forward.5} parent=1 // pred_check
      _
    $region35: #{lenet_forward.5} parent=1 // pred_check_branch
      %481 = sbr.rel (0) target = $region37
    $region36: #{lenet_forward.5} parent=1 // pred_region
      %483 = dma.done [#allocation3], 32
    $region37: #{lenet_forward.5} parent=1 // pred_fallthru
      _
    %484 = vsyncpa [#allocation3], 1

</llo_original>
